<compile_context>
chip_gen: v7x
topology: tpu7x:2x2x1
jax: 0.10.0
libtpu: 0.0.40
codegen_flags: <defaults>
</compile_context>

<pallas_src>
import jax
import jax.numpy as jnp
from jax.experimental import pallas as pl
from jax.experimental.pallas import tpu as pltpu

INPUT_DIM = 320
H1 = 256
H2 = 128
OUT = 1


def _round_up(n, m):
    return ((n + m - 1) // m) * m


def _mlp_kernel(x_ref, w1_ref, b1_ref, w2_ref, b2_ref, w3_ref, b3_ref, o_ref):
    # fc1 + ReLU : MXU in bf16, accumulate/bias/ReLU in f32
    x = x_ref[...].astype(jnp.bfloat16)
    h1 = jnp.dot(x, w1_ref[...], preferred_element_type=jnp.float32)
    h1 = jnp.maximum(h1 + b1_ref[...], 0.0)

    # fc2 + ReLU
    h2 = jnp.dot(h1.astype(jnp.bfloat16), w2_ref[...],
                 preferred_element_type=jnp.float32)
    h2 = jnp.maximum(h2 + b2_ref[...], 0.0)

    # fc3 (out_features = 1): VPU broadcast-multiply + XLU lane reduce instead
    # of a lane-sparse (tb,128)@(128,1) MXU matmul.  w3_ref is (1, H2).
    logits = jnp.sum(h2 * w3_ref[...], axis=-1, keepdims=True) + b3_ref[...]

    # sigmoid: exp -> EUP, approx reciprocal -> EUP (VALU slots stay free)
    o_ref[...] = pl.reciprocal(1.0 + jnp.exp(-logits),
                               approx=True).astype(o_ref.dtype)


def protein_solubility_predictor(x, params, *, tb=256):
    """x: (B, INPUT_DIM) float32.  Returns (B,) float32 (torch .squeeze())."""
    w1, b1, w2, b2, w3, b3 = params
    B, D = x.shape
    assert D == INPUT_DIM

    # Effective batch tile: big (256) for MXU utilization, but never larger
    # than the (8-aligned) batch so small batches are a single grid step.
    tb_eff = min(tb, _round_up(B, 8))
    grid_b = pl.cdiv(B, tb_eff)
    b_pad = grid_b * tb_eff
    if b_pad != B:
        x = jnp.pad(x, ((0, b_pad - B), (0, 0)))

    # bf16 MXU operands (weights cast once here; x cast inside the kernel).
    w1_bf16 = w1.astype(jnp.bfloat16)                     # (320, 256)
    w2_bf16 = w2.astype(jnp.bfloat16)                     # (256, 128)
    w3_row = w3.reshape(1, H2).astype(jnp.float32)        # (1, 128) for VPU reduce
    b3_2d = b3.reshape(1, OUT).astype(jnp.float32)        # (1, 1)

    out = pl.pallas_call(
        _mlp_kernel,
        out_shape=jax.ShapeDtypeStruct((b_pad, OUT), jnp.float32),
        grid_spec=pltpu.PrefetchScalarGridSpec(
            num_scalar_prefetch=0,
            grid=(grid_b,),
            in_specs=[
                pl.BlockSpec((tb_eff, INPUT_DIM), lambda i: (i, 0)),  # x tile
                pl.BlockSpec((INPUT_DIM, H1), lambda i: (0, 0)),      # W1 (bf16, resident)
                pl.BlockSpec((1, H1), lambda i: (0, 0)),              # b1
                pl.BlockSpec((H1, H2), lambda i: (0, 0)),             # W2 (bf16, resident)
                pl.BlockSpec((1, H2), lambda i: (0, 0)),              # b2
                pl.BlockSpec((1, H2), lambda i: (0, 0)),              # w3 row
                pl.BlockSpec((1, OUT), lambda i: (0, 0)),             # b3
            ],
            out_specs=pl.BlockSpec((tb_eff, OUT), lambda i: (i, 0)),
        ),
        compiler_params=pltpu.CompilerParams(
            dimension_semantics=("parallel",),  # batch tiles split across TCs (v7x)
        ),
    )(x, w1_bf16, b1, w2_bf16, b2, w3_row, b3_2d)

    # torch .squeeze() on (B, 1) -> (B,); drop padded rows.
    return out[:B, 0]


def init_params(key):
    """Deterministic init mimicking nn.Linear default (uniform +-1/sqrt(fan_in)).

    Weights stored as (in_features, out_features) = transpose of torch layout.
    """
    def linear(key, fan_in, fan_out):
        kw, kb = jax.random.split(key)
        bound = 1.0 / jnp.sqrt(fan_in)
        w = jax.random.uniform(kw, (fan_in, fan_out), jnp.float32, -bound, bound)
        b = jax.random.uniform(kb, (1, fan_out), jnp.float32, -bound, bound)
        return w, b

    k1, k2, k3 = jax.random.split(key, 3)
    w1, b1 = linear(k1, INPUT_DIM, H1)
    w2, b2 = linear(k2, H1, H2)
    w3, b3 = linear(k3, H2, OUT)
    return (w1, b1, w2, b2, w3, b3)


if __name__ == "__main__":
    key = jax.random.PRNGKey(0)
    kx, kp = jax.random.split(key)

    # B=300 exercises batch padding (300 -> 512) and a 2-step parallel grid.
    B = 300
    x = jax.random.normal(kx, (B, INPUT_DIM), dtype=jnp.float32)
    params = init_params(kp)

    y = protein_solubility_predictor(x, params)
    y = jax.block_until_ready(y)

    # sanity check against plain-JAX f32 reference (eval-mode dropout = id).
    # kernel uses bf16 MXU operands + approx reciprocal -> loose tolerance.
    w1, b1, w2, b2, w3, b3 = params
    h1 = jnp.maximum(x @ w1 + b1, 0.0)
    h2 = jnp.maximum(h1 @ w2 + b2, 0.0)
    ref = jax.nn.sigmoid(h2 @ w3 + b3)[:, 0]
    assert y.shape == (B,)
    err = jnp.max(jnp.abs(y - ref))
    assert err < 2e-2, f"max abs err {err}"

    print("KERNEL_OK")
</pallas_src>

<mosaic_0001>
module attributes {stable_mosaic.version = 11 : i64} {
  func.func @_mlp_kernel(%arg0: i32, %arg1: memref<256x320xf32, #tpu.memory_space<vmem>>, %arg2: memref<320x256xbf16, #tpu.memory_space<vmem>>, %arg3: memref<1x256xf32, #tpu.memory_space<vmem>>, %arg4: memref<256x128xbf16, #tpu.memory_space<vmem>>, %arg5: memref<1x128xf32, #tpu.memory_space<vmem>>, %arg6: memref<1x128xf32, #tpu.memory_space<vmem>>, %arg7: memref<1x1xf32, #tpu.memory_space<vmem>>, %arg8: memref<256x1xf32, #tpu.memory_space<vmem>>) attributes {dimension_semantics = [#tpu.dimension_semantics<parallel>], iteration_bounds = array<i64: 2>, scalar_prefetch = 0 : i64, scratch_operands = 0 : i64, tpu.core_type = #tpu.core_type<tc>, window_params = [{transform_indices = @transform_0, window_bounds = array<i64: 256, 320>}, {pipeline_mode = #tpu.pipeline_mode<synchronous>, transform_indices = @transform_1, window_bounds = array<i64: 320, 256>}, {pipeline_mode = #tpu.pipeline_mode<synchronous>, transform_indices = @transform_2, window_bounds = array<i64: 1, 256>}, {pipeline_mode = #tpu.pipeline_mode<synchronous>, transform_indices = @transform_3, window_bounds = array<i64: 256, 128>}, {pipeline_mode = #tpu.pipeline_mode<synchronous>, transform_indices = @transform_4, window_bounds = array<i64: 1, 128>}, {pipeline_mode = #tpu.pipeline_mode<synchronous>, transform_indices = @transform_5, window_bounds = array<i64: 1, 128>}, {pipeline_mode = #tpu.pipeline_mode<synchronous>, transform_indices = @transform_6, window_bounds = array<i64: 1, 1>}, {transform_indices = @transform_7, window_bounds = array<i64: 256, 1>}]} {
    %c0 = arith.constant 0 : index
    %c0_0 = arith.constant 0 : index
    %0 = vector.load %arg1[%c0, %c0_0] : memref<256x320xf32, #tpu.memory_space<vmem>>, vector<256x320xf32>
    %1 = arith.truncf %0 : vector<256x320xf32> to vector<256x320xbf16>
    %c0_1 = arith.constant 0 : index
    %c0_2 = arith.constant 0 : index
    %2 = vector.load %arg2[%c0_1, %c0_2] : memref<320x256xbf16, #tpu.memory_space<vmem>>, vector<320x256xbf16>
    %cst = arith.constant dense<0.000000e+00> : vector<256x256xf32>
    %3 = tpu.matmul %1, %2, %cst {dimension_numbers = #tpu.dot_dimension_numbers<[1], [0], [0], [1], [0, 0, 1, 1], [], []>} : vector<256x320xbf16>, vector<320x256xbf16>, vector<256x256xf32> -> vector<256x256xf32>
    %c0_3 = arith.constant 0 : index
    %c0_4 = arith.constant 0 : index
    %4 = vector.load %arg3[%c0_3, %c0_4] : memref<1x256xf32, #tpu.memory_space<vmem>>, vector<1x256xf32>
    %5 = vector.broadcast %4 : vector<1x256xf32> to vector<256x256xf32>
    %6 = arith.addf %3, %5 : vector<256x256xf32>
    %cst_5 = arith.constant 0.000000e+00 : f32
    %7 = vector.broadcast %cst_5 : f32 to vector<256x256xf32>
    %8 = arith.maximumf %6, %7 : vector<256x256xf32>
    %9 = arith.truncf %8 : vector<256x256xf32> to vector<256x256xbf16>
    %c0_6 = arith.constant 0 : index
    %c0_7 = arith.constant 0 : index
    %10 = vector.load %arg4[%c0_6, %c0_7] : memref<256x128xbf16, #tpu.memory_space<vmem>>, vector<256x128xbf16>
    %cst_8 = arith.constant dense<0.000000e+00> : vector<256x128xf32>
    %11 = tpu.matmul %9, %10, %cst_8 {dimension_numbers = #tpu.dot_dimension_numbers<[1], [0], [0], [1], [0, 0, 1, 1], [], []>} : vector<256x256xbf16>, vector<256x128xbf16>, vector<256x128xf32> -> vector<256x128xf32>
    %c0_9 = arith.constant 0 : index
    %c0_10 = arith.constant 0 : index
    %12 = vector.load %arg5[%c0_9, %c0_10] : memref<1x128xf32, #tpu.memory_space<vmem>>, vector<1x128xf32>
    %13 = vector.broadcast %12 : vector<1x128xf32> to vector<256x128xf32>
    %14 = arith.addf %11, %13 : vector<256x128xf32>
    %cst_11 = arith.constant 0.000000e+00 : f32
    %15 = vector.broadcast %cst_11 : f32 to vector<256x128xf32>
    %16 = arith.maximumf %14, %15 : vector<256x128xf32>
    %c0_12 = arith.constant 0 : index
    %c0_13 = arith.constant 0 : index
    %17 = vector.load %arg6[%c0_12, %c0_13] : memref<1x128xf32, #tpu.memory_space<vmem>>, vector<1x128xf32>
    %18 = vector.broadcast %17 : vector<1x128xf32> to vector<256x128xf32>
    %19 = arith.mulf %16, %18 : vector<256x128xf32>
    %cst_14 = arith.constant dense<0.000000e+00> : vector<256xf32>
    %20 = vector.multi_reduction <add>, %19, %cst_14 [1] : vector<256x128xf32> to vector<256xf32>
    %21 = vector.shape_cast %20 : vector<256xf32> to vector<256x1xf32>
    %c0_15 = arith.constant 0 : index
    %c0_16 = arith.constant 0 : index
    %22 = vector.load %arg7[%c0_15, %c0_16] : memref<1x1xf32, #tpu.memory_space<vmem>>, vector<1x1xf32>
    %23 = vector.broadcast %22 : vector<1x1xf32> to vector<256x1xf32>
    %24 = arith.addf %21, %23 : vector<256x1xf32>
    %cst_17 = arith.constant 0.000000e+00 : f32
    %25 = vector.broadcast %cst_17 : f32 to vector<256x1xf32>
    %26 = arith.subf %25, %24 : vector<256x1xf32>
    %27 = math.exp %26 : vector<256x1xf32>
    %cst_18 = arith.constant 1.000000e+00 : f32
    %28 = vector.broadcast %cst_18 : f32 to vector<256x1xf32>
    %29 = arith.addf %28, %27 : vector<256x1xf32>
    %30 = tpu.reciprocal %29 {approx = true} : vector<256x1xf32> -> vector<256x1xf32>
    %c0_19 = arith.constant 0 : index
    %c0_20 = arith.constant 0 : index
    %31 = vector.load %arg8[%c0_19, %c0_20] : memref<256x1xf32, #tpu.memory_space<vmem>>, vector<256x1xf32>
    tpu.vector_store %arg8[%c0_19, %c0_20], %30 {strides = array<i32>} : memref<256x1xf32, #tpu.memory_space<vmem>>, vector<256x1xf32>,
    return
  }
  func.func @transform_0(%arg0: i32) -> (i32, i32) {
    %c0_i32 = arith.constant 0 : i32
    %c0_i32_0 = arith.constant 0 : i32
    return %arg0, %c0_i32 : i32, i32
  }
  func.func @transform_1(%arg0: i32) -> (i32, i32) {
    %c0_i32 = arith.constant 0 : i32
    %c0_i32_0 = arith.constant 0 : i32
    %c0_i32_1 = arith.constant 0 : i32
    return %c0_i32, %c0_i32_0 : i32, i32
  }
  func.func @transform_2(%arg0: i32) -> (i32, i32) {
    %c0_i32 = arith.constant 0 : i32
    %c0_i32_0 = arith.constant 0 : i32
    %c0_i32_1 = arith.constant 0 : i32
    return %c0_i32, %c0_i32_0 : i32, i32
  }
  func.func @transform_3(%arg0: i32) -> (i32, i32) {
    %c0_i32 = arith.constant 0 : i32
    %c0_i32_0 = arith.constant 0 : i32
    %c0_i32_1 = arith.constant 0 : i32
    return %c0_i32, %c0_i32_0 : i32, i32
  }
  func.func @transform_4(%arg0: i32) -> (i32, i32) {
    %c0_i32 = arith.constant 0 : i32
    %c0_i32_0 = arith.constant 0 : i32
    %c0_i32_1 = arith.constant 0 : i32
    return %c0_i32, %c0_i32_0 : i32, i32
  }
  func.func @transform_5(%arg0: i32) -> (i32, i32) {
    %c0_i32 = arith.constant 0 : i32
    %c0_i32_0 = arith.constant 0 : i32
    %c0_i32_1 = arith.constant 0 : i32
    return %c0_i32, %c0_i32_0 : i32, i32
  }
  func.func @transform_6(%arg0: i32) -> (i32, i32) {
    %c0_i32 = arith.constant 0 : i32
    %c0_i32_0 = arith.constant 0 : i32
    %c0_i32_1 = arith.constant 0 : i32
    return %c0_i32, %c0_i32_0 : i32, i32
  }
  func.func @transform_7(%arg0: i32) -> (i32, i32) {
    %c0_i32 = arith.constant 0 : i32
    %c0_i32_0 = arith.constant 0 : i32
    return %arg0, %c0_i32 : i32, i32
  }
}

</mosaic_0001>

<llo_original>
// kernel: tpu_custom_call.1
$region0: #{tpu_custom_call.1}
  #allocation0 [shape = 'u32[]', space=smem, size = 0x4, offset = 0x4, fixed_abs, tag = 'smem constant byte address 0x4 - core index']
  #allocation1 [shape = 'u32[144,128]{1,0:T(1,128)}', space=vmem, size = 0x12000, scoped, tag = 'internal scratch']
  #allocation2 [shape = 'f32[1,1]{1,0:T(1,128)S(1)}', space=vmem, size = 0x200, scoped, tag = 'scoped memory for tpu_custom_call.1']
  %s0 = inlined_call_operand.vmem [shape: f32[512,320], index: 0, kind: input, shape index: {}]
  %s1 = inlined_call_operand.vmem [shape: bf16[320,256], index: 1, kind: input, shape index: {}]
  %s2 = inlined_call_operand.vmem [shape: f32[1,256], index: 2, kind: input, shape index: {}]
  %s3 = inlined_call_operand.vmem [shape: bf16[256,128], index: 3, kind: input, shape index: {}]
  %s4 = inlined_call_operand.vmem [shape: f32[1,128], index: 4, kind: input, shape index: {}]
  %s5 = inlined_call_operand.vmem [shape: f32[1,128], index: 5, kind: input, shape index: {}]
  %s6 = inlined_call_operand.<no memory space> [shape: f32[1,1], index: 6, kind: input, shape index: {}]
  %s7 = inlined_call_operand.vmem [shape: f32[512,1], index: 7, kind: output, shape index: {}]
  %s8 = sld [smem:[#allocation0]]
  $region61: #{tpu_custom_call.1} parent=0
    _
  %s10 = ssub.s32 1, %s8
  %s11 = scalar_select 0, %s10, %s8
  %v12 = vstv %s6
  %13 = vst [vmem:[#allocation2] sm:$0x1] %v12
  loop: start=0, step=1, limit=4
  $region2: #{tpu_custom_call.1} parent=0 // loop_pre_header
    _
  $region3: #{tpu_custom_call.1} parent=0 // loop_header
    %s15 = sphi 0, %s19
    %p16 = scmp.ge.s32.totalorder %s15, 4
    %s25 = sphi 0, %s27
    %s28 = sphi 0, %s25
    %s29 = sphi 0, %s28
    %s45 = sphi 0, %s29
    %s49 = sphi 0, %s49
    %s51 = sphi 0, %s49
    %s52 = sphi 0, %s51
    %s66 = sphi 0, %s52
    %s70 = sphi 0, %s70
    %s72 = sphi 0, %s70
    %s73 = sphi 0, %s72
    %s87 = sphi 0, %s73
    %s91 = sphi 0, %s91
    %s93 = sphi 0, %s91
    %s94 = sphi 0, %s93
    %s108 = sphi 0, %s94
    %s112 = sphi 0, %s112
    %s114 = sphi 0, %s112
    %s115 = sphi 0, %s114
    %s129 = sphi 0, %s115
    %s133 = sphi 0, %s133
    %s135 = sphi 0, %s133
    %s136 = sphi 0, %s135
    %s150 = sphi 0, %s136
    %s154 = sphi 0, %s154
    %s156 = sphi 0, %s154
    %s157 = sphi 0, %s156
    %s171 = sphi 0, %s157
    %s177 = sphi 0, %s179
    %s180 = sphi 0, %s177
    %s181 = sphi 0, %s180
    %s197 = sphi 0, %s181
  $region4: #{tpu_custom_call.1} parent=0 // loop_header_branch
    %18 = sbr.rel (%p16) target = $region8
  $region5: #{tpu_custom_call.1} parent=0 // loop_body
    %s20 = ssub.s32 %s15, 1
    %s21 = ssub.s32 %s15, 2
    %s22 = sadd.s32 %s15, 1
    %s23 = ssub.s32 %s15, %s22
    %p24 = scmp.eq.s32.totalorder %s23, 0
    %s26 = sadd.s32 %s25, 1
    %s27 = scalar_select %p24, %s25, %s26
    %p30 = pneg %p24
    %p31 = scmp.eq.s32.totalorder %s15, 1
    %p32 = por %p30, %p31
    %p33 = scmp.ne.s32.totalorder %s25, %s28
    %p34 = scmp.eq.s32.totalorder %s15, 0
    %p35 = por %p33, %p34
    %p36 = scmp.ne.s32.totalorder %s25, %s28
    %p37 = scmp.eq.s32.totalorder %s20, 1
    %p38 = por %p36, %p37
    %p39 = scmp.ne.s32.totalorder %s28, %s29
    %p40 = scmp.eq.s32.totalorder %s20, 0
    %p41 = por %p39, %p40
    %p42 = scmp.ne.s32.totalorder %s28, %s29
    %p43 = scmp.eq.s32.totalorder %s21, 1
    %p44 = por %p42, %p43
    %p46 = scmp.ne.s32.totalorder %s29, %s45
    %p47 = scmp.eq.s32.totalorder %s21, 0
    %p48 = por %p46, %p47
    %s50 = sadd.s32 %s49, 1
    %p53 = scmp.eq.s32.totalorder %s15, 1
    %p54 = scmp.ne.s32.totalorder %s49, %s51
    %p55 = scmp.eq.s32.totalorder %s15, 0
    %p56 = por %p54, %p55
    %p57 = scmp.ne.s32.totalorder %s49, %s51
    %p58 = scmp.eq.s32.totalorder %s20, 1
    %p59 = por %p57, %p58
    %p60 = scmp.ne.s32.totalorder %s51, %s52
    %p61 = scmp.eq.s32.totalorder %s20, 0
    %p62 = por %p60, %p61
    %p63 = scmp.ne.s32.totalorder %s51, %s52
    %p64 = scmp.eq.s32.totalorder %s21, 1
    %p65 = por %p63, %p64
    %p67 = scmp.ne.s32.totalorder %s52, %s66
    %p68 = scmp.eq.s32.totalorder %s21, 0
    %p69 = por %p67, %p68
    %s71 = sadd.s32 %s70, 1
    %p74 = scmp.eq.s32.totalorder %s15, 1
    %p75 = scmp.ne.s32.totalorder %s70, %s72
    %p76 = scmp.eq.s32.totalorder %s15, 0
    %p77 = por %p75, %p76
    %p78 = scmp.ne.s32.totalorder %s70, %s72
    %p79 = scmp.eq.s32.totalorder %s20, 1
    %p80 = por %p78, %p79
    %p81 = scmp.ne.s32.totalorder %s72, %s73
    %p82 = scmp.eq.s32.totalorder %s20, 0
    %p83 = por %p81, %p82
    %p84 = scmp.ne.s32.totalorder %s72, %s73
    %p85 = scmp.eq.s32.totalorder %s21, 1
    %p86 = por %p84, %p85
    %p88 = scmp.ne.s32.totalorder %s73, %s87
    %p89 = scmp.eq.s32.totalorder %s21, 0
    %p90 = por %p88, %p89
    %s92 = sadd.s32 %s91, 1
    %p95 = scmp.eq.s32.totalorder %s15, 1
    %p96 = scmp.ne.s32.totalorder %s91, %s93
    %p97 = scmp.eq.s32.totalorder %s15, 0
    %p98 = por %p96, %p97
    %p99 = scmp.ne.s32.totalorder %s91, %s93
    %p100 = scmp.eq.s32.totalorder %s20, 1
    %p101 = por %p99, %p100
    %p102 = scmp.ne.s32.totalorder %s93, %s94
    %p103 = scmp.eq.s32.totalorder %s20, 0
    %p104 = por %p102, %p103
    %p105 = scmp.ne.s32.totalorder %s93, %s94
    %p106 = scmp.eq.s32.totalorder %s21, 1
    %p107 = por %p105, %p106
    %p109 = scmp.ne.s32.totalorder %s94, %s108
    %p110 = scmp.eq.s32.totalorder %s21, 0
    %p111 = por %p109, %p110
    %s113 = sadd.s32 %s112, 1
    %p116 = scmp.eq.s32.totalorder %s15, 1
    %p117 = scmp.ne.s32.totalorder %s112, %s114
    %p118 = scmp.eq.s32.totalorder %s15, 0
    %p119 = por %p117, %p118
    %p120 = scmp.ne.s32.totalorder %s112, %s114
    %p121 = scmp.eq.s32.totalorder %s20, 1
    %p122 = por %p120, %p121
    %p123 = scmp.ne.s32.totalorder %s114, %s115
    %p124 = scmp.eq.s32.totalorder %s20, 0
    %p125 = por %p123, %p124
    %p126 = scmp.ne.s32.totalorder %s114, %s115
    %p127 = scmp.eq.s32.totalorder %s21, 1
    %p128 = por %p126, %p127
    %p130 = scmp.ne.s32.totalorder %s115, %s129
    %p131 = scmp.eq.s32.totalorder %s21, 0
    %p132 = por %p130, %p131
    %s134 = sadd.s32 %s133, 1
    %p137 = scmp.eq.s32.totalorder %s15, 1
    %p138 = scmp.ne.s32.totalorder %s133, %s135
    %p139 = scmp.eq.s32.totalorder %s15, 0
    %p140 = por %p138, %p139
    %p141 = scmp.ne.s32.totalorder %s133, %s135
    %p142 = scmp.eq.s32.totalorder %s20, 1
    %p143 = por %p141, %p142
    %p144 = scmp.ne.s32.totalorder %s135, %s136
    %p145 = scmp.eq.s32.totalorder %s20, 0
    %p146 = por %p144, %p145
    %p147 = scmp.ne.s32.totalorder %s135, %s136
    %p148 = scmp.eq.s32.totalorder %s21, 1
    %p149 = por %p147, %p148
    %p151 = scmp.ne.s32.totalorder %s136, %s150
    %p152 = scmp.eq.s32.totalorder %s21, 0
    %p153 = por %p151, %p152
    %s155 = sadd.s32 %s154, 1
    %p158 = scmp.eq.s32.totalorder %s15, 1
    %p159 = scmp.ne.s32.totalorder %s154, %s156
    %p160 = scmp.eq.s32.totalorder %s15, 0
    %p161 = por %p159, %p160
    %p162 = scmp.ne.s32.totalorder %s154, %s156
    %p163 = scmp.eq.s32.totalorder %s20, 1
    %p164 = por %p162, %p163
    %p165 = scmp.ne.s32.totalorder %s156, %s157
    %p166 = scmp.eq.s32.totalorder %s20, 0
    %p167 = por %p165, %p166
    %p168 = scmp.ne.s32.totalorder %s156, %s157
    %p169 = scmp.eq.s32.totalorder %s21, 1
    %p170 = por %p168, %p169
    %p172 = scmp.ne.s32.totalorder %s157, %s171
    %p173 = scmp.eq.s32.totalorder %s21, 0
    %p174 = por %p172, %p173
    %s175 = ssub.s32 %s15, %s22
    %p176 = scmp.eq.s32.totalorder %s175, 0
    %s178 = sadd.s32 %s177, 1
    %s179 = scalar_select %p176, %s177, %s178
    %p182 = pneg %p176
    %p183 = scmp.eq.s32.totalorder %s15, 1
    %p184 = por %p182, %p183
    %p185 = scmp.ne.s32.totalorder %s177, %s180
    %p186 = scmp.eq.s32.totalorder %s15, 0
    %p187 = por %p185, %p186
    %p188 = scmp.ne.s32.totalorder %s177, %s180
    %p189 = scmp.eq.s32.totalorder %s20, 1
    %p190 = por %p188, %p189
    %p191 = scmp.ne.s32.totalorder %s180, %s181
    %p192 = scmp.eq.s32.totalorder %s20, 0
    %p193 = por %p191, %p192
    %p194 = scmp.ne.s32.totalorder %s180, %s181
    %p195 = scmp.eq.s32.totalorder %s21, 1
    %p196 = por %p194, %p195
    %p198 = scmp.ne.s32.totalorder %s181, %s197
    %p199 = scmp.eq.s32.totalorder %s21, 0
    %p200 = por %p198, %p199
    %p201 = scmp.le.s32.totalorder 1, %s15
    %p202 = scmp.lt.s32.totalorder %s15, 3
    %p203 = pnand %p201, %p202
    %p204 = pneg %p203
    // Predicated region
    $region9: #{tpu_custom_call.1} parent=5 // pred_check
      _
    $region10: #{tpu_custom_call.1} parent=5 // pred_check_branch
      %206 = sbr.rel (%p203) target = $region12
    $region11: #{tpu_custom_call.1} parent=5 // pred_region
      %s207 = ssub.s32 %s15, 1
      // Predicated region
      $region13: #{tpu_custom_call.1} parent=11 // pred_check
        %p208 = pneg %p62
      $region14: #{tpu_custom_call.1} parent=11 // pred_check_branch
        %210 = sbr.rel (%p208) target = $region16
      $region15: #{tpu_custom_call.1} parent=11 // pred_region
        _
      $region16: #{tpu_custom_call.1} parent=11 // pred_fallthru
        _
      // Predicated region
      $region17: #{tpu_custom_call.1} parent=11 // pred_check
        %p211 = pneg %p83
      $region18: #{tpu_custom_call.1} parent=11 // pred_check_branch
        %213 = sbr.rel (%p211) target = $region20
      $region19: #{tpu_custom_call.1} parent=11 // pred_region
        _
      $region20: #{tpu_custom_call.1} parent=11 // pred_fallthru
        _
      // Predicated region
      $region21: #{tpu_custom_call.1} parent=11 // pred_check
        %p214 = pneg %p104
      $region22: #{tpu_custom_call.1} parent=11 // pred_check_branch
        %216 = sbr.rel (%p214) target = $region24
      $region23: #{tpu_custom_call.1} parent=11 // pred_region
        _
      $region24: #{tpu_custom_call.1} parent=11 // pred_fallthru
        _
      // Predicated region
      $region25: #{tpu_custom_call.1} parent=11 // pred_check
        %p217 = pneg %p125
      $region26: #{tpu_custom_call.1} parent=11 // pred_check_branch
        %219 = sbr.rel (%p217) target = $region28
      $region27: #{tpu_custom_call.1} parent=11 // pred_region
        _
      $region28: #{tpu_custom_call.1} parent=11 // pred_fallthru
        _
      // Predicated region
      $region29: #{tpu_custom_call.1} parent=11 // pred_check
        %p220 = pneg %p146
      $region30: #{tpu_custom_call.1} parent=11 // pred_check_branch
        %222 = sbr.rel (%p220) target = $region32
      $region31: #{tpu_custom_call.1} parent=11 // pred_region
        _
      $region32: #{tpu_custom_call.1} parent=11 // pred_fallthru
        _
      // Predicated region
      $region33: #{tpu_custom_call.1} parent=11 // pred_check
        %p223 = pneg %p167
      $region34: #{tpu_custom_call.1} parent=11 // pred_check_branch
        %225 = sbr.rel (%p223) target = $region36
      $region35: #{tpu_custom_call.1} parent=11 // pred_region
        _
      $region36: #{tpu_custom_call.1} parent=11 // pred_fallthru
        _
    $region12: #{tpu_custom_call.1} parent=5 // pred_fallthru
      _
    %p226 = scmp.lt.s32.totalorder %s15, 2
    // Predicated region
    $region37: #{tpu_custom_call.1} parent=5 // pred_check
      %p227 = pneg %p226
    $region38: #{tpu_custom_call.1} parent=5 // pred_check_branch
      %229 = sbr.rel (%p227) target = $region40
    $region39: #{tpu_custom_call.1} parent=5 // pred_region
      // Predicated region
      $region41: #{tpu_custom_call.1} parent=39 // pred_check
        %p230 = pneg %p35
      $region42: #{tpu_custom_call.1} parent=39 // pred_check_branch
        %232 = sbr.rel (%p230) target = $region44
      $region43: #{tpu_custom_call.1} parent=39 // pred_region
        %s233 = smul.u32 32, %s15
        %p234 = scmp.lt.s32.totalorder %s233, 63
        %s235 = scalar_select %p234, %s233, 63
        %s236 = smul.addr %s235, 3
        %s237 = smul.addr %s236, 8
        %s238 = scalar_lea.vmem %s0, %s237
        %s239 = smul.u32 32, %s15
      $region44: #{tpu_custom_call.1} parent=39 // pred_fallthru
        _
    $region40: #{tpu_custom_call.1} parent=5 // pred_fallthru
      _
    %p240 = scmp.le.s32.totalorder 1, %s15
    %p241 = scmp.lt.s32.totalorder %s15, 3
    %p242 = pnand %p240, %p241
    %p243 = pneg %p242
    // Predicated region
    $region45: #{tpu_custom_call.1} parent=5 // pred_check
      _
    $region46: #{tpu_custom_call.1} parent=5 // pred_check_branch
      %245 = sbr.rel (%p242) target = $region48
    $region47: #{tpu_custom_call.1} parent=5 // pred_region
      %s246 = ssub.s32 %s15, 1
      %s247 = smul.u32 32, %s20
      %p248 = scmp.lt.s32.totalorder %s247, 63
      %s249 = scalar_select %p248, %s247, 63
      %s250 = smul.addr %s249, 3
      %s251 = smul.addr %s250, 8
      %s252 = scalar_lea.vmem %s0, %s251
      %p253 = pneg %p41
      %p254 = pneg %p38
      %p255 = pneg %p62
      %p256 = pneg %p59
      %p257 = pneg %p83
      %p258 = pneg %p80
      %p259 = pneg %p104
      %p260 = pneg %p101
      %p261 = pneg %p125
      %p262 = pneg %p122
      %p263 = pneg %p146
      %p264 = pneg %p143
      %p265 = pneg %p167
      %p266 = pneg %p164
      %p267 = pneg %p193
      %p268 = pneg %p190
      %s269 = smul.u32 32, %s20
      %p270 = scmp.lt.s32.totalorder %s269, 63
      %s271 = scalar_select %p270, %s269, 63
      %s272 = smul.addr %s271, 8
      %s273 = scalar_lea.vmem %s7, %s272
      %s274 = smul.u32 32, %s20
      %p275 = scmp.lt.s32.totalorder %s274, 63
      %s276 = scalar_select %p275, %s274, 63
      %s277 = smul.addr %s276, 3
      %s278 = smul.addr %s277, 8
      %s279 = scalar_lea.vmem %s0, %s278
      %s280 = smul.u32 32, %s20
      %s281 = smul.u32 32, %s20
      %p282 = scmp.lt.s32.totalorder %s281, 63
      %s283 = scalar_select %p282, %s281, 63
      %s284 = smul.addr %s283, 8
      %s285 = scalar_lea.vmem %s7, %s284
      %s286 = smul.u32 32, %s20
      %v288 = vld [vmem:[%s279] sm:$0xff]
      %v289 = vld [vmem:[%s279 + $0x8] sm:$0xff]
      %v290 = vld [vmem:[%s279 + $0x10] sm:$0xff]
      %v291 = vld [vmem:[%s279 + $0x18] sm:$0xff]
      %v292 = vld [vmem:[%s279 + $0x20] sm:$0xff]
      %v293 = vld [vmem:[%s279 + $0x28] sm:$0xff]
      %v294 = vld [vmem:[%s279 + $0x30] sm:$0xff]
      %v295 = vld [vmem:[%s279 + $0x38] sm:$0xff]
      %v296 = vld [vmem:[%s279 + $0x40] sm:$0xff]
      %v297 = vld [vmem:[%s279 + $0x48] sm:$0xff]
      %v298 = vld [vmem:[%s279 + $0x50] sm:$0xff]
      %v299 = vld [vmem:[%s279 + $0x58] sm:$0xff]
      %v300 = vld [vmem:[%s279 + $0x60] sm:$0xff]
      %v301 = vld [vmem:[%s279 + $0x68] sm:$0xff]
      %v302 = vld [vmem:[%s279 + $0x70] sm:$0xff]
      %v303 = vld [vmem:[%s279 + $0x78] sm:$0xff]
      %v304 = vld [vmem:[%s279 + $0x80] sm:$0xff]
      %v305 = vld [vmem:[%s279 + $0x88] sm:$0xff]
      %v306 = vld [vmem:[%s279 + $0x90] sm:$0xff]
      %v307 = vld [vmem:[%s279 + $0x98] sm:$0xff]
      %v308 = vld [vmem:[%s279 + $0xa0] sm:$0xff]
      %v309 = vld [vmem:[%s279 + $0xa8] sm:$0xff]
      %v310 = vld [vmem:[%s279 + $0xb0] sm:$0xff]
      %v311 = vld [vmem:[%s279 + $0xb8] sm:$0xff]
      %v312 = vld [vmem:[%s279 + $0xc0] sm:$0xff]
      %v313 = vld [vmem:[%s279 + $0xc8] sm:$0xff]
      %v314 = vld [vmem:[%s279 + $0xd0] sm:$0xff]
      %v315 = vld [vmem:[%s279 + $0xd8] sm:$0xff]
      %v316 = vld [vmem:[%s279 + $0xe0] sm:$0xff]
      %v317 = vld [vmem:[%s279 + $0xe8] sm:$0xff]
      %v318 = vld [vmem:[%s279 + $0xf0] sm:$0xff]
      %v319 = vld [vmem:[%s279 + $0xf8] sm:$0xff]
      %v320 = vld [vmem:[%s279 + $0x100] sm:$0xff]
      %v321 = vld [vmem:[%s279 + $0x108] sm:$0xff]
      %v322 = vld [vmem:[%s279 + $0x110] sm:$0xff]
      %v323 = vld [vmem:[%s279 + $0x118] sm:$0xff]
      %v324 = vld [vmem:[%s279 + $0x120] sm:$0xff]
      %v325 = vld [vmem:[%s279 + $0x128] sm:$0xff]
      %v326 = vld [vmem:[%s279 + $0x130] sm:$0xff]
      %v327 = vld [vmem:[%s279 + $0x138] sm:$0xff]
      %v328 = vld [vmem:[%s279 + $0x140] sm:$0xff]
      %v329 = vld [vmem:[%s279 + $0x148] sm:$0xff]
      %v330 = vld [vmem:[%s279 + $0x150] sm:$0xff]
      %v331 = vld [vmem:[%s279 + $0x158] sm:$0xff]
      %v332 = vld [vmem:[%s279 + $0x160] sm:$0xff]
      %v333 = vld [vmem:[%s279 + $0x168] sm:$0xff]
      %v334 = vld [vmem:[%s279 + $0x170] sm:$0xff]
      %v335 = vld [vmem:[%s279 + $0x178] sm:$0xff]
      %v336 = vld [vmem:[%s279 + $0x180] sm:$0xff]
      %v337 = vld [vmem:[%s279 + $0x188] sm:$0xff]
      %v338 = vld [vmem:[%s279 + $0x190] sm:$0xff]
      %v339 = vld [vmem:[%s279 + $0x198] sm:$0xff]
      %v340 = vld [vmem:[%s279 + $0x1a0] sm:$0xff]
      %v341 = vld [vmem:[%s279 + $0x1a8] sm:$0xff]
      %v342 = vld [vmem:[%s279 + $0x1b0] sm:$0xff]
      %v343 = vld [vmem:[%s279 + $0x1b8] sm:$0xff]
      %v344 = vld [vmem:[%s279 + $0x1c0] sm:$0xff]
      %v345 = vld [vmem:[%s279 + $0x1c8] sm:$0xff]
      %v346 = vld [vmem:[%s279 + $0x1d0] sm:$0xff]
      %v347 = vld [vmem:[%s279 + $0x1d8] sm:$0xff]
      %v348 = vld [vmem:[%s279 + $0x1e0] sm:$0xff]
      %v349 = vld [vmem:[%s279 + $0x1e8] sm:$0xff]
      %v350 = vld [vmem:[%s279 + $0x1f0] sm:$0xff]
      %v351 = vld [vmem:[%s279 + $0x1f8] sm:$0xff]
      %v352 = vld [vmem:[%s279 + $0x200] sm:$0xff]
      %v353 = vld [vmem:[%s279 + $0x208] sm:$0xff]
      %v354 = vld [vmem:[%s279 + $0x210] sm:$0xff]
      %v355 = vld [vmem:[%s279 + $0x218] sm:$0xff]
      %v356 = vld [vmem:[%s279 + $0x220] sm:$0xff]
      %v357 = vld [vmem:[%s279 + $0x228] sm:$0xff]
      %v358 = vld [vmem:[%s279 + $0x230] sm:$0xff]
      %v359 = vld [vmem:[%s279 + $0x238] sm:$0xff]
      %v360 = vld [vmem:[%s279 + $0x240] sm:$0xff]
      %v361 = vld [vmem:[%s279 + $0x248] sm:$0xff]
      %v362 = vld [vmem:[%s279 + $0x250] sm:$0xff]
      %v363 = vld [vmem:[%s279 + $0x258] sm:$0xff]
      %v364 = vld [vmem:[%s279 + $0x260] sm:$0xff]
      %v365 = vld [vmem:[%s279 + $0x268] sm:$0xff]
      %v366 = vld [vmem:[%s279 + $0x270] sm:$0xff]
      %v367 = vld [vmem:[%s279 + $0x278] sm:$0xff]
      %v368 = vld [vmem:[%s279 + $0x280] sm:$0xff]
      %v369 = vld [vmem:[%s279 + $0x288] sm:$0xff]
      %v370 = vld [vmem:[%s279 + $0x290] sm:$0xff]
      %v371 = vld [vmem:[%s279 + $0x298] sm:$0xff]
      %v372 = vld [vmem:[%s279 + $0x2a0] sm:$0xff]
      %v373 = vld [vmem:[%s279 + $0x2a8] sm:$0xff]
      %v374 = vld [vmem:[%s279 + $0x2b0] sm:$0xff]
      %v375 = vld [vmem:[%s279 + $0x2b8] sm:$0xff]
      %v376 = vld [vmem:[%s279 + $0x2c0] sm:$0xff]
      %v377 = vld [vmem:[%s279 + $0x2c8] sm:$0xff]
      %v378 = vld [vmem:[%s279 + $0x2d0] sm:$0xff]
      %v379 = vld [vmem:[%s279 + $0x2d8] sm:$0xff]
      %v380 = vld [vmem:[%s279 + $0x2e0] sm:$0xff]
      %v381 = vld [vmem:[%s279 + $0x2e8] sm:$0xff]
      %v382 = vld [vmem:[%s279 + $0x2f0] sm:$0xff]
      %v383 = vld [vmem:[%s279 + $0x2f8] sm:$0xff]
      %v384 = vpack.c.bf16 %v291, %v288
      %v385 = vpack.c.bf16 %v292, %v289
      %v386 = vpack.c.bf16 %v293, %v290
      %v387 = vpack.c.bf16 %v297, %v294
      %v388 = vpack.c.bf16 %v298, %v295
      %v389 = vpack.c.bf16 %v299, %v296
      %v390 = vpack.c.bf16 %v303, %v300
      %v391 = vpack.c.bf16 %v304, %v301
      %v392 = vpack.c.bf16 %v305, %v302
      %v393 = vpack.c.bf16 %v309, %v306
      %v394 = vpack.c.bf16 %v310, %v307
      %v395 = vpack.c.bf16 %v311, %v308
      %v396 = vpack.c.bf16 %v315, %v312
      %v397 = vpack.c.bf16 %v316, %v313
      %v398 = vpack.c.bf16 %v317, %v314
      %v399 = vpack.c.bf16 %v321, %v318
      %v400 = vpack.c.bf16 %v322, %v319
      %v401 = vpack.c.bf16 %v323, %v320
      %v402 = vpack.c.bf16 %v327, %v324
      %v403 = vpack.c.bf16 %v328, %v325
      %v404 = vpack.c.bf16 %v329, %v326
      %v405 = vpack.c.bf16 %v333, %v330
      %v406 = vpack.c.bf16 %v334, %v331
      %v407 = vpack.c.bf16 %v335, %v332
      %v408 = vpack.c.bf16 %v339, %v336
      %v409 = vpack.c.bf16 %v340, %v337
      %v410 = vpack.c.bf16 %v341, %v338
      %v411 = vpack.c.bf16 %v345, %v342
      %v412 = vpack.c.bf16 %v346, %v343
      %v413 = vpack.c.bf16 %v347, %v344
      %v414 = vpack.c.bf16 %v351, %v348
      %v415 = vpack.c.bf16 %v352, %v349
      %v416 = vpack.c.bf16 %v353, %v350
      %v417 = vpack.c.bf16 %v357, %v354
      %v418 = vpack.c.bf16 %v358, %v355
      %v419 = vpack.c.bf16 %v359, %v356
      %v420 = vpack.c.bf16 %v363, %v360
      %v421 = vpack.c.bf16 %v364, %v361
      %v422 = vpack.c.bf16 %v365, %v362
      %v423 = vpack.c.bf16 %v369, %v366
      %v424 = vpack.c.bf16 %v370, %v367
      %v425 = vpack.c.bf16 %v371, %v368
      %v426 = vpack.c.bf16 %v375, %v372
      %v427 = vpack.c.bf16 %v376, %v373
      %v428 = vpack.c.bf16 %v377, %v374
      %v429 = vpack.c.bf16 %v381, %v378
      %v430 = vpack.c.bf16 %v382, %v379
      %v431 = vpack.c.bf16 %v383, %v380
      %v432 = vld [vmem:[%s1] sm:$0xff]
      %v433 = vld [vmem:[%s1 + $0x8] sm:$0xff]
      %v434 = vld [vmem:[%s1 + $0x10] sm:$0xff]
      %v435 = vld [vmem:[%s1 + $0x18] sm:$0xff]
      %v436 = vld [vmem:[%s1 + $0x20] sm:$0xff]
      %v437 = vld [vmem:[%s1 + $0x28] sm:$0xff]
      %v438 = vld [vmem:[%s1 + $0x30] sm:$0xff]
      %v439 = vld [vmem:[%s1 + $0x38] sm:$0xff]
      %v440 = vld [vmem:[%s1 + $0x40] sm:$0xff]
      %v441 = vld [vmem:[%s1 + $0x48] sm:$0xff]
      %v442 = vld [vmem:[%s1 + $0x50] sm:$0xff]
      %v443 = vld [vmem:[%s1 + $0x58] sm:$0xff]
      %v444 = vld [vmem:[%s1 + $0x60] sm:$0xff]
      %v445 = vld [vmem:[%s1 + $0x68] sm:$0xff]
      %v446 = vld [vmem:[%s1 + $0x70] sm:$0xff]
      %v447 = vld [vmem:[%s1 + $0x78] sm:$0xff]
      %v448 = vld [vmem:[%s1 + $0x80] sm:$0xff]
      %v449 = vld [vmem:[%s1 + $0x88] sm:$0xff]
      %v450 = vld [vmem:[%s1 + $0x90] sm:$0xff]
      %v451 = vld [vmem:[%s1 + $0x98] sm:$0xff]
      %v452 = vld [vmem:[%s1 + $0xa0] sm:$0xff]
      %v453 = vld [vmem:[%s1 + $0xa8] sm:$0xff]
      %v454 = vld [vmem:[%s1 + $0xb0] sm:$0xff]
      %v455 = vld [vmem:[%s1 + $0xb8] sm:$0xff]
      %v456 = vld [vmem:[%s1 + $0xc0] sm:$0xff]
      %v457 = vld [vmem:[%s1 + $0xc8] sm:$0xff]
      %v458 = vld [vmem:[%s1 + $0xd0] sm:$0xff]
      %v459 = vld [vmem:[%s1 + $0xd8] sm:$0xff]
      %v460 = vld [vmem:[%s1 + $0xe0] sm:$0xff]
      %v461 = vld [vmem:[%s1 + $0xe8] sm:$0xff]
      %v462 = vld [vmem:[%s1 + $0xf0] sm:$0xff]
      %v463 = vld [vmem:[%s1 + $0xf8] sm:$0xff]
      %v464 = vld [vmem:[%s1 + $0x100] sm:$0xff]
      %v465 = vld [vmem:[%s1 + $0x108] sm:$0xff]
      %v466 = vld [vmem:[%s1 + $0x110] sm:$0xff]
      %v467 = vld [vmem:[%s1 + $0x118] sm:$0xff]
      %v468 = vld [vmem:[%s1 + $0x120] sm:$0xff]
      %v469 = vld [vmem:[%s1 + $0x128] sm:$0xff]
      %v470 = vld [vmem:[%s1 + $0x130] sm:$0xff]
      %v471 = vld [vmem:[%s1 + $0x138] sm:$0xff]
      %v472 = vld [vmem:[%s2] sm:$0x3]
      %v474 = vlaneseq
      %v475 = vshrl.u32 %v474, 7
      %v476 = vsub.s32 0, %v475
      %v477 = vrot.slane %v472, %v476
      %v478 = vlaneseq
      %v479 = vshrl.u32 %v478, 7
      %v480 = vsub.s32 1, %v479
      %v481 = vrot.slane %v472, %v480
      %v524 = vunpack.c.l.b16 %v432
      %v525 = vunpack.c.h.b16 %v432
      %v526 = vunpack.c.l.b16 %v433
      %v527 = vunpack.c.h.b16 %v433
      %v528 = vunpack.c.l.b16 %v434
      %v529 = vunpack.c.h.b16 %v434
      %v530 = vunpack.c.l.b16 %v435
      %v531 = vunpack.c.h.b16 %v435
      %v532 = vunpack.c.l.b16 %v436
      %v533 = vunpack.c.h.b16 %v436
      %v534 = vunpack.c.l.b16 %v437
      %v535 = vunpack.c.h.b16 %v437
      %v536 = vunpack.c.l.b16 %v438
      %v537 = vunpack.c.h.b16 %v438
      %v538 = vunpack.c.l.b16 %v439
      %v539 = vunpack.c.h.b16 %v439
      %v540 = vunpack.c.l.b16 %v440
      %v541 = vunpack.c.h.b16 %v440
      %v542 = vunpack.c.l.b16 %v441
      %v543 = vunpack.c.h.b16 %v441
      %v544 = vunpack.c.l.b16 %v442
      %v545 = vunpack.c.h.b16 %v442
      %v546 = vunpack.c.l.b16 %v443
      %v547 = vunpack.c.h.b16 %v443
      %v548 = vunpack.c.l.b16 %v444
      %v549 = vunpack.c.h.b16 %v444
      %v550 = vunpack.c.l.b16 %v445
      %v551 = vunpack.c.h.b16 %v445
      %v552 = vunpack.c.l.b16 %v446
      %v553 = vunpack.c.h.b16 %v446
      %v554 = vunpack.c.l.b16 %v447
      %v555 = vunpack.c.h.b16 %v447
      %v556 = vunpack.c.l.b16 %v448
      %v557 = vunpack.c.h.b16 %v448
      %v558 = vunpack.c.l.b16 %v449
      %v559 = vunpack.c.h.b16 %v449
      %v560 = vunpack.c.l.b16 %v450
      %v561 = vunpack.c.h.b16 %v450
      %v562 = vunpack.c.l.b16 %v451
      %v563 = vunpack.c.h.b16 %v451
      %v564 = vunpack.c.l.b16 %v452
      %v565 = vunpack.c.h.b16 %v452
      %v566 = vunpack.c.l.b16 %v453
      %v567 = vunpack.c.h.b16 %v453
      %v568 = vunpack.c.l.b16 %v454
      %v569 = vunpack.c.h.b16 %v454
      %v570 = vunpack.c.l.b16 %v455
      %v571 = vunpack.c.h.b16 %v455
      %v572 = vunpack.c.l.b16 %v456
      %v573 = vunpack.c.h.b16 %v456
      %v574 = vunpack.c.l.b16 %v457
      %v575 = vunpack.c.h.b16 %v457
      %v576 = vunpack.c.l.b16 %v458
      %v577 = vunpack.c.h.b16 %v458
      %v578 = vunpack.c.l.b16 %v459
      %v579 = vunpack.c.h.b16 %v459
      %v580 = vunpack.c.l.b16 %v460
      %v581 = vunpack.c.h.b16 %v460
      %v582 = vunpack.c.l.b16 %v461
      %v583 = vunpack.c.h.b16 %v461
      %v584 = vunpack.c.l.b16 %v462
      %v585 = vunpack.c.h.b16 %v462
      %v586 = vunpack.c.l.b16 %v463
      %v587 = vunpack.c.h.b16 %v463
      %v588 = vunpack.c.l.b16 %v464
      %v589 = vunpack.c.h.b16 %v464
      %v590 = vunpack.c.l.b16 %v465
      %v591 = vunpack.c.h.b16 %v465
      %v592 = vunpack.c.l.b16 %v466
      %v593 = vunpack.c.h.b16 %v466
      %v594 = vunpack.c.l.b16 %v467
      %v595 = vunpack.c.h.b16 %v467
      %v596 = vunpack.c.l.b16 %v468
      %v597 = vunpack.c.h.b16 %v468
      %v598 = vunpack.c.l.b16 %v469
      %v599 = vunpack.c.h.b16 %v469
      %v600 = vunpack.c.l.b16 %v470
      %v601 = vunpack.c.h.b16 %v470
      %v602 = vunpack.c.l.b16 %v471
      %v603 = vunpack.c.h.b16 %v471
      %v604 = vpack.c.b16 %v526, %v524
      %v605 = vpack.c.b16 %v527, %v525
      %v606 = vpack.c.b16 %v530, %v528
      %v607 = vpack.c.b16 %v531, %v529
      %v608 = vpack.c.b16 %v534, %v532
      %v609 = vpack.c.b16 %v535, %v533
      %v610 = vpack.c.b16 %v538, %v536
      %v611 = vpack.c.b16 %v539, %v537
      %v612 = vpack.c.b16 %v542, %v540
      %v613 = vpack.c.b16 %v543, %v541
      %v614 = vpack.c.b16 %v546, %v544
      %v615 = vpack.c.b16 %v547, %v545
      %v616 = vpack.c.b16 %v550, %v548
      %v617 = vpack.c.b16 %v551, %v549
      %v618 = vpack.c.b16 %v554, %v552
      %v619 = vpack.c.b16 %v555, %v553
      %v620 = vpack.c.b16 %v558, %v556
      %v621 = vpack.c.b16 %v559, %v557
      %v622 = vpack.c.b16 %v562, %v560
      %v623 = vpack.c.b16 %v563, %v561
      %v624 = vpack.c.b16 %v566, %v564
      %v625 = vpack.c.b16 %v567, %v565
      %v626 = vpack.c.b16 %v570, %v568
      %v627 = vpack.c.b16 %v571, %v569
      %v628 = vpack.c.b16 %v574, %v572
      %v629 = vpack.c.b16 %v575, %v573
      %v630 = vpack.c.b16 %v578, %v576
      %v631 = vpack.c.b16 %v579, %v577
      %v632 = vpack.c.b16 %v582, %v580
      %v633 = vpack.c.b16 %v583, %v581
      %v634 = vpack.c.b16 %v586, %v584
      %v635 = vpack.c.b16 %v587, %v585
      %v636 = vpack.c.b16 %v590, %v588
      %v637 = vpack.c.b16 %v591, %v589
      %v638 = vpack.c.b16 %v594, %v592
      %v639 = vpack.c.b16 %v595, %v593
      %v640 = vpack.c.b16 %v598, %v596
      %v641 = vpack.c.b16 %v599, %v597
      %v642 = vpack.c.b16 %v602, %v600
      %v643 = vpack.c.b16 %v603, %v601
      %vm684 = vcmask 523264
      %v686 = vsel %vm684, %v386, 0
      %v689 = vsel %vm684, %v389, 0
      %v692 = vsel %vm684, %v392, 0
      %v695 = vsel %vm684, %v395, 0
      %v698 = vsel %vm684, %v398, 0
      %v701 = vsel %vm684, %v401, 0
      %v704 = vsel %vm684, %v404, 0
      %v707 = vsel %vm684, %v407, 0
      %v710 = vsel %vm684, %v410, 0
      %v713 = vsel %vm684, %v413, 0
      %v716 = vsel %vm684, %v416, 0
      %v719 = vsel %vm684, %v419, 0
      %v722 = vsel %vm684, %v422, 0
      %v725 = vsel %vm684, %v425, 0
      %v728 = vsel %vm684, %v428, 0
      %v731 = vsel %vm684, %v431, 0
      %733 = vmatprep.subr.bf16.mxu0 %v605
      %734 = vmatpush1.bf16.msra.mxu0 %v604
      %735 = vmatprep.subr.bf16.mxu0 %v607
      %736 = vmatpush1.bf16.msra.mxu0 %v606
      %737 = vmatprep.subr.bf16.mxu0 %v609
      %738 = vmatpush1.bf16.msra.mxu0 %v608
      %739 = vmatprep.subr.bf16.mxu0 %v611
      %740 = vmatpush1.bf16.msra.mxu0 %v610
      %741 = vmatprep.subr.bf16.mxu0 %v613
      %742 = vmatpush1.bf16.msra.mxu0 %v612
      %743 = vmatprep.subr.bf16.mxu0 %v615
      %744 = vmatpush1.bf16.msra.mxu0 %v614
      %745 = vmatprep.subr.bf16.mxu0 %v617
      %746 = vmatpush1.bf16.msra.mxu0 %v616
      %747 = vmatprep.subr.bf16.mxu0 %v619
      %748 = vmatpush1.bf16.msra.mxu0 %v618
      %749 = vmatprep.subr.bf16.mxu0 %v621
      %750 = vmatpush1.bf16.msra.mxu0 %v620
      %751 = vmatprep.subr.bf16.mxu0 %v623
      %752 = vmatpush1.bf16.msra.mxu0 %v622
      %753 = vmatprep.subr.bf16.mxu0 %v625
      %754 = vmatpush1.bf16.msra.mxu0 %v624
      %755 = vmatprep.subr.bf16.mxu0 %v627
      %756 = vmatpush1.bf16.msra.mxu0 %v626
      %757 = vmatprep.subr.bf16.mxu0 %v629
      %758 = vmatpush1.bf16.msra.mxu0 %v628
      %759 = vmatprep.subr.bf16.mxu0 %v631
      %760 = vmatpush1.bf16.msra.mxu0 %v630
      %761 = vmatprep.subr.bf16.mxu0 %v633
      %762 = vmatpush1.bf16.msra.mxu0 %v632
      %763 = vmatprep.subr.bf16.mxu0 %v635
      %764 = vmatpush1.bf16.msra.mxu0 %v634
      %765 = vmatprep.mubr.bf16.mxu0 %v385
      %766 = vmatmul.mubr.bf16.gmra.mrb[0].mxu0 %v384
      %v767 = vpop.f32.mrb[0].mxu0
      %v768 = vadd.f32 %v477, %v767
      %v769 = vpop.f32.mrb[0].mxu0
      %v770 = vadd.f32 %v481, %v769
      %v771 = vpop.f32.mrb[0].mxu0
      %v772 = vadd.f32 %v477, %v771
      %v773 = vpop.f32.mrb[0].mxu0
      %v774 = vadd.f32 %v481, %v773
      %775 = vmatprep.mubr.bf16.mxu0 %v388
      %776 = vmatmul.mubr.bf16.gmra.mrb[0].mxu0 %v387
      %v777 = vpop.f32.mrb[0].mxu0
      %v778 = vadd.f32 %v477, %v777
      %v779 = vpop.f32.mrb[0].mxu0
      %v780 = vadd.f32 %v481, %v779
      %v781 = vpop.f32.mrb[0].mxu0
      %v782 = vadd.f32 %v477, %v781
      %v783 = vpop.f32.mrb[0].mxu0
      %v784 = vadd.f32 %v481, %v783
      %785 = vmatprep.mubr.bf16.mxu0 %v391
      %786 = vmatmul.mubr.bf16.gmra.mrb[0].mxu0 %v390
      %v787 = vpop.f32.mrb[0].mxu0
      %v788 = vadd.f32 %v477, %v787
      %v789 = vpop.f32.mrb[0].mxu0
      %v790 = vadd.f32 %v481, %v789
      %v791 = vpop.f32.mrb[0].mxu0
      %v792 = vadd.f32 %v477, %v791
      %v793 = vpop.f32.mrb[0].mxu0
      %v794 = vadd.f32 %v481, %v793
      %795 = vmatprep.mubr.bf16.mxu0 %v394
      %796 = vmatmul.mubr.bf16.gmra.mrb[0].mxu0 %v393
      %v797 = vpop.f32.mrb[0].mxu0
      %v798 = vadd.f32 %v477, %v797
      %v799 = vpop.f32.mrb[0].mxu0
      %v800 = vadd.f32 %v481, %v799
      %v801 = vpop.f32.mrb[0].mxu0
      %v802 = vadd.f32 %v477, %v801
      %v803 = vpop.f32.mrb[0].mxu0
      %v804 = vadd.f32 %v481, %v803
      %805 = vmatprep.mubr.bf16.mxu0 %v397
      %806 = vmatmul.mubr.bf16.gmra.mrb[0].mxu0 %v396
      %v807 = vpop.f32.mrb[0].mxu0
      %v808 = vadd.f32 %v477, %v807
      %v809 = vpop.f32.mrb[0].mxu0
      %v810 = vadd.f32 %v481, %v809
      %v811 = vpop.f32.mrb[0].mxu0
      %v812 = vadd.f32 %v477, %v811
      %v813 = vpop.f32.mrb[0].mxu0
      %v814 = vadd.f32 %v481, %v813
      %815 = vmatprep.mubr.bf16.mxu0 %v400
      %816 = vmatmul.mubr.bf16.gmra.mrb[0].mxu0 %v399
      %v817 = vpop.f32.mrb[0].mxu0
      %v818 = vadd.f32 %v477, %v817
      %v819 = vpop.f32.mrb[0].mxu0
      %v820 = vadd.f32 %v481, %v819
      %v821 = vpop.f32.mrb[0].mxu0
      %v822 = vadd.f32 %v477, %v821
      %v823 = vpop.f32.mrb[0].mxu0
      %v824 = vadd.f32 %v481, %v823
      %825 = vmatprep.mubr.bf16.mxu0 %v403
      %826 = vmatmul.mubr.bf16.gmra.mrb[0].mxu0 %v402
      %v827 = vpop.f32.mrb[0].mxu0
      %v828 = vadd.f32 %v477, %v827
      %v829 = vpop.f32.mrb[0].mxu0
      %v830 = vadd.f32 %v481, %v829
      %v831 = vpop.f32.mrb[0].mxu0
      %v832 = vadd.f32 %v477, %v831
      %v833 = vpop.f32.mrb[0].mxu0
      %v834 = vadd.f32 %v481, %v833
      %835 = vmatprep.mubr.bf16.mxu0 %v406
      %836 = vmatmul.mubr.bf16.gmra.mrb[0].mxu0 %v405
      %v837 = vpop.f32.mrb[0].mxu0
      %v838 = vadd.f32 %v477, %v837
      %v839 = vpop.f32.mrb[0].mxu0
      %v840 = vadd.f32 %v481, %v839
      %v841 = vpop.f32.mrb[0].mxu0
      %v842 = vadd.f32 %v477, %v841
      %v843 = vpop.f32.mrb[0].mxu0
      %v844 = vadd.f32 %v481, %v843
      %845 = vmatprep.mubr.bf16.mxu0 %v409
      %846 = vmatmul.mubr.bf16.gmra.mrb[0].mxu0 %v408
      %v847 = vpop.f32.mrb[0].mxu0
      %v848 = vadd.f32 %v477, %v847
      %v849 = vpop.f32.mrb[0].mxu0
      %v850 = vadd.f32 %v481, %v849
      %v851 = vpop.f32.mrb[0].mxu0
      %v852 = vadd.f32 %v477, %v851
      %v853 = vpop.f32.mrb[0].mxu0
      %v854 = vadd.f32 %v481, %v853
      %855 = vmatprep.mubr.bf16.mxu0 %v412
      %856 = vmatmul.mubr.bf16.gmra.mrb[0].mxu0 %v411
      %v857 = vpop.f32.mrb[0].mxu0
      %v858 = vadd.f32 %v477, %v857
      %v859 = vpop.f32.mrb[0].mxu0
      %v860 = vadd.f32 %v481, %v859
      %v861 = vpop.f32.mrb[0].mxu0
      %v862 = vadd.f32 %v477, %v861
      %v863 = vpop.f32.mrb[0].mxu0
      %v864 = vadd.f32 %v481, %v863
      %865 = vmatprep.mubr.bf16.mxu0 %v415
      %866 = vmatmul.mubr.bf16.gmra.mrb[0].mxu0 %v414
      %v867 = vpop.f32.mrb[0].mxu0
      %v868 = vadd.f32 %v477, %v867
      %v869 = vpop.f32.mrb[0].mxu0
      %v870 = vadd.f32 %v481, %v869
      %v871 = vpop.f32.mrb[0].mxu0
      %v872 = vadd.f32 %v477, %v871
      %v873 = vpop.f32.mrb[0].mxu0
      %v874 = vadd.f32 %v481, %v873
      %875 = vmatprep.mubr.bf16.mxu0 %v418
      %876 = vmatmul.mubr.bf16.gmra.mrb[0].mxu0 %v417
      %v877 = vpop.f32.mrb[0].mxu0
      %v878 = vadd.f32 %v477, %v877
      %v879 = vpop.f32.mrb[0].mxu0
      %v880 = vadd.f32 %v481, %v879
      %v881 = vpop.f32.mrb[0].mxu0
      %v882 = vadd.f32 %v477, %v881
      %v883 = vpop.f32.mrb[0].mxu0
      %v884 = vadd.f32 %v481, %v883
      %885 = vmatprep.mubr.bf16.mxu0 %v421
      %886 = vmatmul.mubr.bf16.gmra.mrb[0].mxu0 %v420
      %v887 = vpop.f32.mrb[0].mxu0
      %v888 = vadd.f32 %v477, %v887
      %v889 = vpop.f32.mrb[0].mxu0
      %v890 = vadd.f32 %v481, %v889
      %v891 = vpop.f32.mrb[0].mxu0
      %v892 = vadd.f32 %v477, %v891
      %v893 = vpop.f32.mrb[0].mxu0
      %v894 = vadd.f32 %v481, %v893
      %895 = vmatprep.mubr.bf16.mxu0 %v424
      %896 = vmatmul.mubr.bf16.gmra.mrb[0].mxu0 %v423
      %v897 = vpop.f32.mrb[0].mxu0
      %v898 = vadd.f32 %v477, %v897
      %v899 = vpop.f32.mrb[0].mxu0
      %v900 = vadd.f32 %v481, %v899
      %v901 = vpop.f32.mrb[0].mxu0
      %v902 = vadd.f32 %v477, %v901
      %v903 = vpop.f32.mrb[0].mxu0
      %v904 = vadd.f32 %v481, %v903
      %905 = vmatprep.mubr.bf16.mxu0 %v427
      %906 = vmatmul.mubr.bf16.gmra.mrb[0].mxu0 %v426
      %v907 = vpop.f32.mrb[0].mxu0
      %v908 = vadd.f32 %v477, %v907
      %v909 = vpop.f32.mrb[0].mxu0
      %v910 = vadd.f32 %v481, %v909
      %v911 = vpop.f32.mrb[0].mxu0
      %v912 = vadd.f32 %v477, %v911
      %v913 = vpop.f32.mrb[0].mxu0
      %v914 = vadd.f32 %v481, %v913
      %915 = vmatprep.mubr.bf16.mxu0 %v430
      %916 = vmatmul.mubr.bf16.gmra.mrb[0].mxu0 %v429
      %v917 = vpop.f32.mrb[0].mxu0
      %v918 = vadd.f32 %v477, %v917
      %v919 = vpop.f32.mrb[0].mxu0
      %v920 = vadd.f32 %v481, %v919
      %v921 = vpop.f32.mrb[0].mxu0
      %v922 = vadd.f32 %v477, %v921
      %v923 = vpop.f32.mrb[0].mxu0
      %v924 = vadd.f32 %v481, %v923
      %925 = vdwg.mxu0
      %926 = vmatprep.subr.bf16.mxu0 %v637
      %927 = vmatpush1.bf16.msra.mxu0 %v636
      %928 = vmatprep.subr.bf16.mxu0 %v639
      %929 = vmatpush1.bf16.msra.mxu0 %v638
      %930 = vmatprep.subr.bf16.mxu0 %v641
      %931 = vmatpush1.bf16.msra.mxu0 %v640
      %932 = vmatprep.subr.bf16.mxu0 %v643
      %933 = vmatpush1.bf16.msra.mxu0 %v642
      %934 = vmatprep.subr.bf16.mxu0 0
      %935 = vmatpush1.bf16.msra.mxu0 0
      %936 = vmatprep.subr.bf16.mxu0 0
      %937 = vmatpush1.bf16.msra.mxu0 0
      %938 = vmatprep.subr.bf16.mxu0 0
      %939 = vmatpush1.bf16.msra.mxu0 0
      %940 = vmatprep.subr.bf16.mxu0 0
      %941 = vmatpush1.bf16.msra.mxu0 0
      %942 = vmatprep.subr.bf16.mxu0 0
      %943 = vmatpush1.bf16.msra.mxu0 0
      %944 = vmatprep.subr.bf16.mxu0 0
      %945 = vmatpush1.bf16.msra.mxu0 0
      %946 = vmatprep.subr.bf16.mxu0 0
      %947 = vmatpush1.bf16.msra.mxu0 0
      %948 = vmatprep.subr.bf16.mxu0 0
      %949 = vmatpush1.bf16.msra.mxu0 0
      %950 = vmatprep.subr.bf16.mxu0 0
      %951 = vmatpush1.bf16.msra.mxu0 0
      %952 = vmatprep.subr.bf16.mxu0 0
      %953 = vmatpush1.bf16.msra.mxu0 0
      %954 = vmatprep.subr.bf16.mxu0 0
      %955 = vmatpush1.bf16.msra.mxu0 0
      %956 = vmatprep.subr.bf16.mxu0 0
      %957 = vmatpush1.bf16.msra.mxu0 0
      %958 = vmatprep.mubr.bf16.mxu0 0
      %959 = vmatmul.mubr.bf16.gmra.mrb[0].mxu0 %v686
      %v960 = vpop.f32.mrb[0].mxu0
      %v961 = vadd.f32 %v768, %v960
      %v962 = vpop.f32.mrb[0].mxu0
      %v963 = vadd.f32 %v770, %v962
      %v964 = vpop.f32.mrb[0].mxu0
      %v965 = vadd.f32 %v772, %v964
      %v966 = vpop.f32.mrb[0].mxu0
      %v967 = vadd.f32 %v774, %v966
      %968 = vmatprep.mubr.bf16.mxu0 0
      %969 = vmatmul.mubr.bf16.gmra.mrb[0].mxu0 %v689
      %v970 = vpop.f32.mrb[0].mxu0
      %v971 = vadd.f32 %v778, %v970
      %v972 = vpop.f32.mrb[0].mxu0
      %v973 = vadd.f32 %v780, %v972
      %v974 = vpop.f32.mrb[0].mxu0
      %v975 = vadd.f32 %v782, %v974
      %v976 = vpop.f32.mrb[0].mxu0
      %v977 = vadd.f32 %v784, %v976
      %978 = vmatprep.mubr.bf16.mxu0 0
      %979 = vmatmul.mubr.bf16.gmra.mrb[0].mxu0 %v692
      %v980 = vpop.f32.mrb[0].mxu0
      %v981 = vadd.f32 %v788, %v980
      %v982 = vpop.f32.mrb[0].mxu0
      %v983 = vadd.f32 %v790, %v982
      %v984 = vpop.f32.mrb[0].mxu0
      %v985 = vadd.f32 %v792, %v984
      %v986 = vpop.f32.mrb[0].mxu0
      %v987 = vadd.f32 %v794, %v986
      %988 = vmatprep.mubr.bf16.mxu0 0
      %989 = vmatmul.mubr.bf16.gmra.mrb[0].mxu0 %v695
      %v990 = vpop.f32.mrb[0].mxu0
      %v991 = vadd.f32 %v798, %v990
      %v992 = vpop.f32.mrb[0].mxu0
      %v993 = vadd.f32 %v800, %v992
      %v994 = vpop.f32.mrb[0].mxu0
      %v995 = vadd.f32 %v802, %v994
      %v996 = vpop.f32.mrb[0].mxu0
      %v997 = vadd.f32 %v804, %v996
      %998 = vmatprep.mubr.bf16.mxu0 0
      %999 = vmatmul.mubr.bf16.gmra.mrb[0].mxu0 %v698
      %v1000 = vpop.f32.mrb[0].mxu0
      %v1001 = vadd.f32 %v808, %v1000
      %v1002 = vpop.f32.mrb[0].mxu0
      %v1003 = vadd.f32 %v810, %v1002
      %v1004 = vpop.f32.mrb[0].mxu0
      %v1005 = vadd.f32 %v812, %v1004
      %v1006 = vpop.f32.mrb[0].mxu0
      %v1007 = vadd.f32 %v814, %v1006
      %1008 = vmatprep.mubr.bf16.mxu0 0
      %1009 = vmatmul.mubr.bf16.gmra.mrb[0].mxu0 %v701
      %v1010 = vpop.f32.mrb[0].mxu0
      %v1011 = vadd.f32 %v818, %v1010
      %v1012 = vpop.f32.mrb[0].mxu0
      %v1013 = vadd.f32 %v820, %v1012
      %v1014 = vpop.f32.mrb[0].mxu0
      %v1015 = vadd.f32 %v822, %v1014
      %v1016 = vpop.f32.mrb[0].mxu0
      %v1017 = vadd.f32 %v824, %v1016
      %1018 = vmatprep.mubr.bf16.mxu0 0
      %1019 = vmatmul.mubr.bf16.gmra.mrb[0].mxu0 %v704
      %v1020 = vpop.f32.mrb[0].mxu0
      %v1021 = vadd.f32 %v828, %v1020
      %v1022 = vpop.f32.mrb[0].mxu0
      %v1023 = vadd.f32 %v830, %v1022
      %v1024 = vpop.f32.mrb[0].mxu0
      %v1025 = vadd.f32 %v832, %v1024
      %v1026 = vpop.f32.mrb[0].mxu0
      %v1027 = vadd.f32 %v834, %v1026
      %1028 = vmatprep.mubr.bf16.mxu0 0
      %1029 = vmatmul.mubr.bf16.gmra.mrb[0].mxu0 %v707
      %v1030 = vpop.f32.mrb[0].mxu0
      %v1031 = vadd.f32 %v838, %v1030
      %v1032 = vpop.f32.mrb[0].mxu0
      %v1033 = vadd.f32 %v840, %v1032
      %v1034 = vpop.f32.mrb[0].mxu0
      %v1035 = vadd.f32 %v842, %v1034
      %v1036 = vpop.f32.mrb[0].mxu0
      %v1037 = vadd.f32 %v844, %v1036
      %1038 = vmatprep.mubr.bf16.mxu0 0
      %1039 = vmatmul.mubr.bf16.gmra.mrb[0].mxu0 %v710
      %v1040 = vpop.f32.mrb[0].mxu0
      %v1041 = vadd.f32 %v848, %v1040
      %v1042 = vpop.f32.mrb[0].mxu0
      %v1043 = vadd.f32 %v850, %v1042
      %v1044 = vpop.f32.mrb[0].mxu0
      %v1045 = vadd.f32 %v852, %v1044
      %v1046 = vpop.f32.mrb[0].mxu0
      %v1047 = vadd.f32 %v854, %v1046
      %1048 = vmatprep.mubr.bf16.mxu0 0
      %1049 = vmatmul.mubr.bf16.gmra.mrb[0].mxu0 %v713
      %v1050 = vpop.f32.mrb[0].mxu0
      %v1051 = vadd.f32 %v858, %v1050
      %v1052 = vpop.f32.mrb[0].mxu0
      %v1053 = vadd.f32 %v860, %v1052
      %v1054 = vpop.f32.mrb[0].mxu0
      %v1055 = vadd.f32 %v862, %v1054
      %v1056 = vpop.f32.mrb[0].mxu0
      %v1057 = vadd.f32 %v864, %v1056
      %1058 = vmatprep.mubr.bf16.mxu0 0
      %1059 = vmatmul.mubr.bf16.gmra.mrb[0].mxu0 %v716
      %v1060 = vpop.f32.mrb[0].mxu0
      %v1061 = vadd.f32 %v868, %v1060
      %v1062 = vpop.f32.mrb[0].mxu0
      %v1063 = vadd.f32 %v870, %v1062
      %v1064 = vpop.f32.mrb[0].mxu0
      %v1065 = vadd.f32 %v872, %v1064
      %v1066 = vpop.f32.mrb[0].mxu0
      %v1067 = vadd.f32 %v874, %v1066
      %1068 = vmatprep.mubr.bf16.mxu0 0
      %1069 = vmatmul.mubr.bf16.gmra.mrb[0].mxu0 %v719
      %v1070 = vpop.f32.mrb[0].mxu0
      %v1071 = vadd.f32 %v878, %v1070
      %v1072 = vpop.f32.mrb[0].mxu0
      %v1073 = vadd.f32 %v880, %v1072
      %v1074 = vpop.f32.mrb[0].mxu0
      %v1075 = vadd.f32 %v882, %v1074
      %v1076 = vpop.f32.mrb[0].mxu0
      %v1077 = vadd.f32 %v884, %v1076
      %1078 = vmatprep.mubr.bf16.mxu0 0
      %1079 = vmatmul.mubr.bf16.gmra.mrb[0].mxu0 %v722
      %v1080 = vpop.f32.mrb[0].mxu0
      %v1081 = vadd.f32 %v888, %v1080
      %v1082 = vpop.f32.mrb[0].mxu0
      %v1083 = vadd.f32 %v890, %v1082
      %v1084 = vpop.f32.mrb[0].mxu0
      %v1085 = vadd.f32 %v892, %v1084
      %v1086 = vpop.f32.mrb[0].mxu0
      %v1087 = vadd.f32 %v894, %v1086
      %1088 = vmatprep.mubr.bf16.mxu0 0
      %1089 = vmatmul.mubr.bf16.gmra.mrb[0].mxu0 %v725
      %v1090 = vpop.f32.mrb[0].mxu0
      %v1091 = vadd.f32 %v898, %v1090
      %v1092 = vpop.f32.mrb[0].mxu0
      %v1093 = vadd.f32 %v900, %v1092
      %v1094 = vpop.f32.mrb[0].mxu0
      %v1095 = vadd.f32 %v902, %v1094
      %v1096 = vpop.f32.mrb[0].mxu0
      %v1097 = vadd.f32 %v904, %v1096
      %1098 = vmatprep.mubr.bf16.mxu0 0
      %1099 = vmatmul.mubr.bf16.gmra.mrb[0].mxu0 %v728
      %v1100 = vpop.f32.mrb[0].mxu0
      %v1101 = vadd.f32 %v908, %v1100
      %v1102 = vpop.f32.mrb[0].mxu0
      %v1103 = vadd.f32 %v910, %v1102
      %v1104 = vpop.f32.mrb[0].mxu0
      %v1105 = vadd.f32 %v912, %v1104
      %v1106 = vpop.f32.mrb[0].mxu0
      %v1107 = vadd.f32 %v914, %v1106
      %1108 = vmatprep.mubr.bf16.mxu0 0
      %1109 = vmatmul.mubr.bf16.gmra.mrb[0].mxu0 %v731
      %v1110 = vpop.f32.mrb[0].mxu0
      %v1111 = vadd.f32 %v918, %v1110
      %v1112 = vpop.f32.mrb[0].mxu0
      %v1113 = vadd.f32 %v920, %v1112
      %v1114 = vpop.f32.mrb[0].mxu0
      %v1115 = vadd.f32 %v922, %v1114
      %v1116 = vpop.f32.mrb[0].mxu0
      %v1117 = vadd.f32 %v924, %v1116
      %1118 = vdwg.mxu0
      %v1119 = vmax.f32 %v961, 0.0
      %v1120 = vmax.f32 %v963, 0.0
      %v1121 = vmax.f32 %v965, 0.0
      %v1122 = vmax.f32 %v967, 0.0
      %v1123 = vmax.f32 %v971, 0.0
      %v1124 = vmax.f32 %v973, 0.0
      %v1125 = vmax.f32 %v975, 0.0
      %v1126 = vmax.f32 %v977, 0.0
      %v1127 = vmax.f32 %v981, 0.0
      %v1128 = vmax.f32 %v983, 0.0
      %v1129 = vmax.f32 %v985, 0.0
      %v1130 = vmax.f32 %v987, 0.0
      %v1131 = vmax.f32 %v991, 0.0
      %v1132 = vmax.f32 %v993, 0.0
      %v1133 = vmax.f32 %v995, 0.0
      %v1134 = vmax.f32 %v997, 0.0
      %v1135 = vmax.f32 %v1001, 0.0
      %v1136 = vmax.f32 %v1003, 0.0
      %v1137 = vmax.f32 %v1005, 0.0
      %v1138 = vmax.f32 %v1007, 0.0
      %v1139 = vmax.f32 %v1011, 0.0
      %v1140 = vmax.f32 %v1013, 0.0
      %v1141 = vmax.f32 %v1015, 0.0
      %v1142 = vmax.f32 %v1017, 0.0
      %v1143 = vmax.f32 %v1021, 0.0
      %v1144 = vmax.f32 %v1023, 0.0
      %v1145 = vmax.f32 %v1025, 0.0
      %v1146 = vmax.f32 %v1027, 0.0
      %v1147 = vmax.f32 %v1031, 0.0
      %v1148 = vmax.f32 %v1033, 0.0
      %v1149 = vmax.f32 %v1035, 0.0
      %v1150 = vmax.f32 %v1037, 0.0
      %v1151 = vmax.f32 %v1041, 0.0
      %v1152 = vmax.f32 %v1043, 0.0
      %v1153 = vmax.f32 %v1045, 0.0
      %v1154 = vmax.f32 %v1047, 0.0
      %v1155 = vmax.f32 %v1051, 0.0
      %v1156 = vmax.f32 %v1053, 0.0
      %v1157 = vmax.f32 %v1055, 0.0
      %v1158 = vmax.f32 %v1057, 0.0
      %v1159 = vmax.f32 %v1061, 0.0
      %v1160 = vmax.f32 %v1063, 0.0
      %v1161 = vmax.f32 %v1065, 0.0
      %v1162 = vmax.f32 %v1067, 0.0
      %v1163 = vmax.f32 %v1071, 0.0
      %v1164 = vmax.f32 %v1073, 0.0
      %v1165 = vmax.f32 %v1075, 0.0
      %v1166 = vmax.f32 %v1077, 0.0
      %v1167 = vmax.f32 %v1081, 0.0
      %v1168 = vmax.f32 %v1083, 0.0
      %v1169 = vmax.f32 %v1085, 0.0
      %v1170 = vmax.f32 %v1087, 0.0
      %v1171 = vmax.f32 %v1091, 0.0
      %v1172 = vmax.f32 %v1093, 0.0
      %v1173 = vmax.f32 %v1095, 0.0
      %v1174 = vmax.f32 %v1097, 0.0
      %v1175 = vmax.f32 %v1101, 0.0
      %v1176 = vmax.f32 %v1103, 0.0
      %v1177 = vmax.f32 %v1105, 0.0
      %v1178 = vmax.f32 %v1107, 0.0
      %v1179 = vmax.f32 %v1111, 0.0
      %v1180 = vmax.f32 %v1113, 0.0
      %v1181 = vmax.f32 %v1115, 0.0
      %v1182 = vmax.f32 %v1117, 0.0
      %v1183 = vpack.c.bf16 %v1121, %v1119
      %v1184 = vpack.c.bf16 %v1122, %v1120
      %v1185 = vpack.c.bf16 %v1125, %v1123
      %v1186 = vpack.c.bf16 %v1126, %v1124
      %v1187 = vpack.c.bf16 %v1129, %v1127
      %v1188 = vpack.c.bf16 %v1130, %v1128
      %v1189 = vpack.c.bf16 %v1133, %v1131
      %v1190 = vpack.c.bf16 %v1134, %v1132
      %v1191 = vpack.c.bf16 %v1137, %v1135
      %v1192 = vpack.c.bf16 %v1138, %v1136
      %v1193 = vpack.c.bf16 %v1141, %v1139
      %v1194 = vpack.c.bf16 %v1142, %v1140
      %v1195 = vpack.c.bf16 %v1145, %v1143
      %v1196 = vpack.c.bf16 %v1146, %v1144
      %v1197 = vpack.c.bf16 %v1149, %v1147
      %v1198 = vpack.c.bf16 %v1150, %v1148
      %v1199 = vpack.c.bf16 %v1153, %v1151
      %v1200 = vpack.c.bf16 %v1154, %v1152
      %v1201 = vpack.c.bf16 %v1157, %v1155
      %v1202 = vpack.c.bf16 %v1158, %v1156
      %v1203 = vpack.c.bf16 %v1161, %v1159
      %v1204 = vpack.c.bf16 %v1162, %v1160
      %v1205 = vpack.c.bf16 %v1165, %v1163
      %v1206 = vpack.c.bf16 %v1166, %v1164
      %v1207 = vpack.c.bf16 %v1169, %v1167
      %v1208 = vpack.c.bf16 %v1170, %v1168
      %v1209 = vpack.c.bf16 %v1173, %v1171
      %v1210 = vpack.c.bf16 %v1174, %v1172
      %v1211 = vpack.c.bf16 %v1177, %v1175
      %v1212 = vpack.c.bf16 %v1178, %v1176
      %v1213 = vpack.c.bf16 %v1181, %v1179
      %v1214 = vpack.c.bf16 %v1182, %v1180
      %v1215 = vld [vmem:[%s3] sm:$0xf]
      %v1216 = vld [vmem:[%s3 + $0x4] sm:$0xf]
      %v1217 = vld [vmem:[%s3 + $0x8] sm:$0xf]
      %v1218 = vld [vmem:[%s3 + $0xc] sm:$0xf]
      %v1219 = vld [vmem:[%s3 + $0x10] sm:$0xf]
      %v1220 = vld [vmem:[%s3 + $0x14] sm:$0xf]
      %v1221 = vld [vmem:[%s3 + $0x18] sm:$0xf]
      %v1222 = vld [vmem:[%s3 + $0x1c] sm:$0xf]
      %v1223 = vld [vmem:[%s3 + $0x20] sm:$0xf]
      %v1224 = vld [vmem:[%s3 + $0x24] sm:$0xf]
      %v1225 = vld [vmem:[%s3 + $0x28] sm:$0xf]
      %v1226 = vld [vmem:[%s3 + $0x2c] sm:$0xf]
      %v1227 = vld [vmem:[%s3 + $0x30] sm:$0xf]
      %v1228 = vld [vmem:[%s3 + $0x34] sm:$0xf]
      %v1229 = vld [vmem:[%s3 + $0x38] sm:$0xf]
      %v1230 = vld [vmem:[%s3 + $0x3c] sm:$0xf]
      %v1231 = vld [vmem:[%s3 + $0x40] sm:$0xf]
      %v1232 = vld [vmem:[%s3 + $0x44] sm:$0xf]
      %v1233 = vld [vmem:[%s3 + $0x48] sm:$0xf]
      %v1234 = vld [vmem:[%s3 + $0x4c] sm:$0xf]
      %v1235 = vld [vmem:[%s3 + $0x50] sm:$0xf]
      %v1236 = vld [vmem:[%s3 + $0x54] sm:$0xf]
      %v1237 = vld [vmem:[%s3 + $0x58] sm:$0xf]
      %v1238 = vld [vmem:[%s3 + $0x5c] sm:$0xf]
      %v1239 = vld [vmem:[%s3 + $0x60] sm:$0xf]
      %v1240 = vld [vmem:[%s3 + $0x64] sm:$0xf]
      %v1241 = vld [vmem:[%s3 + $0x68] sm:$0xf]
      %v1242 = vld [vmem:[%s3 + $0x6c] sm:$0xf]
      %v1243 = vld [vmem:[%s3 + $0x70] sm:$0xf]
      %v1244 = vld [vmem:[%s3 + $0x74] sm:$0xf]
      %v1245 = vld [vmem:[%s3 + $0x78] sm:$0xf]
      %v1246 = vld [vmem:[%s3 + $0x7c] sm:$0xf]
      %v1247 = vld [vmem:[%s4] sm:$0x1]
      %v1249 = vlaneseq
      %v1250 = vshrl.u32 %v1249, 7
      %v1251 = vsub.s32 0, %v1250
      %v1252 = vrot.slane %v1247, %v1251
      %v1286 = vunpack.c.l.b16 %v1215
      %v1287 = vunpack.c.l.b16 %v1216
      %v1288 = vunpack.c.l.b16 %v1217
      %v1289 = vunpack.c.l.b16 %v1218
      %v1290 = vunpack.c.l.b16 %v1219
      %v1291 = vunpack.c.l.b16 %v1220
      %v1292 = vunpack.c.l.b16 %v1221
      %v1293 = vunpack.c.l.b16 %v1222
      %v1294 = vunpack.c.l.b16 %v1223
      %v1295 = vunpack.c.l.b16 %v1224
      %v1296 = vunpack.c.l.b16 %v1225
      %v1297 = vunpack.c.l.b16 %v1226
      %v1298 = vunpack.c.l.b16 %v1227
      %v1299 = vunpack.c.l.b16 %v1228
      %v1300 = vunpack.c.l.b16 %v1229
      %v1301 = vunpack.c.l.b16 %v1230
      %v1302 = vunpack.c.l.b16 %v1231
      %v1303 = vunpack.c.l.b16 %v1232
      %v1304 = vunpack.c.l.b16 %v1233
      %v1305 = vunpack.c.l.b16 %v1234
      %v1306 = vunpack.c.l.b16 %v1235
      %v1307 = vunpack.c.l.b16 %v1236
      %v1308 = vunpack.c.l.b16 %v1237
      %v1309 = vunpack.c.l.b16 %v1238
      %v1310 = vunpack.c.l.b16 %v1239
      %v1311 = vunpack.c.l.b16 %v1240
      %v1312 = vunpack.c.l.b16 %v1241
      %v1313 = vunpack.c.l.b16 %v1242
      %v1314 = vunpack.c.l.b16 %v1243
      %v1315 = vunpack.c.l.b16 %v1244
      %v1316 = vunpack.c.l.b16 %v1245
      %v1317 = vunpack.c.l.b16 %v1246
      %v1318 = vpack.c.b16 %v1287, %v1286
      %v1319 = vpack.c.b16 %v1289, %v1288
      %v1320 = vpack.c.b16 %v1291, %v1290
      %v1321 = vpack.c.b16 %v1293, %v1292
      %v1322 = vpack.c.b16 %v1295, %v1294
      %v1323 = vpack.c.b16 %v1297, %v1296
      %v1324 = vpack.c.b16 %v1299, %v1298
      %v1325 = vpack.c.b16 %v1301, %v1300
      %v1326 = vpack.c.b16 %v1303, %v1302
      %v1327 = vpack.c.b16 %v1305, %v1304
      %v1328 = vpack.c.b16 %v1307, %v1306
      %v1329 = vpack.c.b16 %v1309, %v1308
      %v1330 = vpack.c.b16 %v1311, %v1310
      %v1331 = vpack.c.b16 %v1313, %v1312
      %v1332 = vpack.c.b16 %v1315, %v1314
      %v1333 = vpack.c.b16 %v1317, %v1316
      %1350 = vmatprep.subr.bf16.mxu0 0
      %1351 = vmatpush1.bf16.msra.mxu0 %v1318
      %1352 = vmatprep.subr.bf16.mxu0 0
      %1353 = vmatpush1.bf16.msra.mxu0 %v1319
      %1354 = vmatprep.subr.bf16.mxu0 0
      %1355 = vmatpush1.bf16.msra.mxu0 %v1320
      %1356 = vmatprep.subr.bf16.mxu0 0
      %1357 = vmatpush1.bf16.msra.mxu0 %v1321
      %1358 = vmatprep.subr.bf16.mxu0 0
      %1359 = vmatpush1.bf16.msra.mxu0 %v1322
      %1360 = vmatprep.subr.bf16.mxu0 0
      %1361 = vmatpush1.bf16.msra.mxu0 %v1323
      %1362 = vmatprep.subr.bf16.mxu0 0
      %1363 = vmatpush1.bf16.msra.mxu0 %v1324
      %1364 = vmatprep.subr.bf16.mxu0 0
      %1365 = vmatpush1.bf16.msra.mxu0 %v1325
      %1366 = vmatprep.subr.bf16.mxu0 0
      %1367 = vmatpush1.bf16.msra.mxu0 %v1326
      %1368 = vmatprep.subr.bf16.mxu0 0
      %1369 = vmatpush1.bf16.msra.mxu0 %v1327
      %1370 = vmatprep.subr.bf16.mxu0 0
      %1371 = vmatpush1.bf16.msra.mxu0 %v1328
      %1372 = vmatprep.subr.bf16.mxu0 0
      %1373 = vmatpush1.bf16.msra.mxu0 %v1329
      %1374 = vmatprep.subr.bf16.mxu0 0
      %1375 = vmatpush1.bf16.msra.mxu0 %v1330
      %1376 = vmatprep.subr.bf16.mxu0 0
      %1377 = vmatpush1.bf16.msra.mxu0 %v1331
      %1378 = vmatprep.subr.bf16.mxu0 0
      %1379 = vmatpush1.bf16.msra.mxu0 %v1332
      %1380 = vmatprep.subr.bf16.mxu0 0
      %1381 = vmatpush1.bf16.msra.mxu0 %v1333
      %1382 = vmatprep.mubr.bf16.mxu0 %v1184
      %1383 = vmatmul.mubr.bf16.gmra.mrb[0].mxu0 %v1183
      %v1384 = vpop.f32.mrb[0].mxu0
      %v1385 = vadd.f32 %v1252, %v1384
      %v1386 = vpop.f32.mrb[0].mxu0
      %v1387 = vpop.f32.mrb[0].mxu0
      %v1388 = vadd.f32 %v1252, %v1387
      %v1389 = vpop.f32.mrb[0].mxu0
      %1390 = vmatprep.mubr.bf16.mxu0 %v1186
      %1391 = vmatmul.mubr.bf16.gmra.mrb[0].mxu0 %v1185
      %v1392 = vpop.f32.mrb[0].mxu0
      %v1393 = vadd.f32 %v1252, %v1392
      %v1394 = vpop.f32.mrb[0].mxu0
      %v1395 = vpop.f32.mrb[0].mxu0
      %v1396 = vadd.f32 %v1252, %v1395
      %v1397 = vpop.f32.mrb[0].mxu0
      %1398 = vmatprep.mubr.bf16.mxu0 %v1188
      %1399 = vmatmul.mubr.bf16.gmra.mrb[0].mxu0 %v1187
      %v1400 = vpop.f32.mrb[0].mxu0
      %v1401 = vadd.f32 %v1252, %v1400
      %v1402 = vpop.f32.mrb[0].mxu0
      %v1403 = vpop.f32.mrb[0].mxu0
      %v1404 = vadd.f32 %v1252, %v1403
      %v1405 = vpop.f32.mrb[0].mxu0
      %1406 = vmatprep.mubr.bf16.mxu0 %v1190
      %1407 = vmatmul.mubr.bf16.gmra.mrb[0].mxu0 %v1189
      %v1408 = vpop.f32.mrb[0].mxu0
      %v1409 = vadd.f32 %v1252, %v1408
      %v1410 = vpop.f32.mrb[0].mxu0
      %v1411 = vpop.f32.mrb[0].mxu0
      %v1412 = vadd.f32 %v1252, %v1411
      %v1413 = vpop.f32.mrb[0].mxu0
      %1414 = vmatprep.mubr.bf16.mxu0 %v1192
      %1415 = vmatmul.mubr.bf16.gmra.mrb[0].mxu0 %v1191
      %v1416 = vpop.f32.mrb[0].mxu0
      %v1417 = vadd.f32 %v1252, %v1416
      %v1418 = vpop.f32.mrb[0].mxu0
      %v1419 = vpop.f32.mrb[0].mxu0
      %v1420 = vadd.f32 %v1252, %v1419
      %v1421 = vpop.f32.mrb[0].mxu0
      %1422 = vmatprep.mubr.bf16.mxu0 %v1194
      %1423 = vmatmul.mubr.bf16.gmra.mrb[0].mxu0 %v1193
      %v1424 = vpop.f32.mrb[0].mxu0
      %v1425 = vadd.f32 %v1252, %v1424
      %v1426 = vpop.f32.mrb[0].mxu0
      %v1427 = vpop.f32.mrb[0].mxu0
      %v1428 = vadd.f32 %v1252, %v1427
      %v1429 = vpop.f32.mrb[0].mxu0
      %1430 = vmatprep.mubr.bf16.mxu0 %v1196
      %1431 = vmatmul.mubr.bf16.gmra.mrb[0].mxu0 %v1195
      %v1432 = vpop.f32.mrb[0].mxu0
      %v1433 = vadd.f32 %v1252, %v1432
      %v1434 = vpop.f32.mrb[0].mxu0
      %v1435 = vpop.f32.mrb[0].mxu0
      %v1436 = vadd.f32 %v1252, %v1435
      %v1437 = vpop.f32.mrb[0].mxu0
      %1438 = vmatprep.mubr.bf16.mxu0 %v1198
      %1439 = vmatmul.mubr.bf16.gmra.mrb[0].mxu0 %v1197
      %v1440 = vpop.f32.mrb[0].mxu0
      %v1441 = vadd.f32 %v1252, %v1440
      %v1442 = vpop.f32.mrb[0].mxu0
      %v1443 = vpop.f32.mrb[0].mxu0
      %v1444 = vadd.f32 %v1252, %v1443
      %v1445 = vpop.f32.mrb[0].mxu0
      %1446 = vmatprep.mubr.bf16.mxu0 %v1200
      %1447 = vmatmul.mubr.bf16.gmra.mrb[0].mxu0 %v1199
      %v1448 = vpop.f32.mrb[0].mxu0
      %v1449 = vadd.f32 %v1252, %v1448
      %v1450 = vpop.f32.mrb[0].mxu0
      %v1451 = vpop.f32.mrb[0].mxu0
      %v1452 = vadd.f32 %v1252, %v1451
      %v1453 = vpop.f32.mrb[0].mxu0
      %1454 = vmatprep.mubr.bf16.mxu0 %v1202
      %1455 = vmatmul.mubr.bf16.gmra.mrb[0].mxu0 %v1201
      %v1456 = vpop.f32.mrb[0].mxu0
      %v1457 = vadd.f32 %v1252, %v1456
      %v1458 = vpop.f32.mrb[0].mxu0
      %v1459 = vpop.f32.mrb[0].mxu0
      %v1460 = vadd.f32 %v1252, %v1459
      %v1461 = vpop.f32.mrb[0].mxu0
      %1462 = vmatprep.mubr.bf16.mxu0 %v1204
      %1463 = vmatmul.mubr.bf16.gmra.mrb[0].mxu0 %v1203
      %v1464 = vpop.f32.mrb[0].mxu0
      %v1465 = vadd.f32 %v1252, %v1464
      %v1466 = vpop.f32.mrb[0].mxu0
      %v1467 = vpop.f32.mrb[0].mxu0
      %v1468 = vadd.f32 %v1252, %v1467
      %v1469 = vpop.f32.mrb[0].mxu0
      %1470 = vmatprep.mubr.bf16.mxu0 %v1206
      %1471 = vmatmul.mubr.bf16.gmra.mrb[0].mxu0 %v1205
      %v1472 = vpop.f32.mrb[0].mxu0
      %v1473 = vadd.f32 %v1252, %v1472
      %v1474 = vpop.f32.mrb[0].mxu0
      %v1475 = vpop.f32.mrb[0].mxu0
      %v1476 = vadd.f32 %v1252, %v1475
      %v1477 = vpop.f32.mrb[0].mxu0
      %1478 = vmatprep.mubr.bf16.mxu0 %v1208
      %1479 = vmatmul.mubr.bf16.gmra.mrb[0].mxu0 %v1207
      %v1480 = vpop.f32.mrb[0].mxu0
      %v1481 = vadd.f32 %v1252, %v1480
      %v1482 = vpop.f32.mrb[0].mxu0
      %v1483 = vpop.f32.mrb[0].mxu0
      %v1484 = vadd.f32 %v1252, %v1483
      %v1485 = vpop.f32.mrb[0].mxu0
      %1486 = vmatprep.mubr.bf16.mxu0 %v1210
      %1487 = vmatmul.mubr.bf16.gmra.mrb[0].mxu0 %v1209
      %v1488 = vpop.f32.mrb[0].mxu0
      %v1489 = vadd.f32 %v1252, %v1488
      %v1490 = vpop.f32.mrb[0].mxu0
      %v1491 = vpop.f32.mrb[0].mxu0
      %v1492 = vadd.f32 %v1252, %v1491
      %v1493 = vpop.f32.mrb[0].mxu0
      %1494 = vmatprep.mubr.bf16.mxu0 %v1212
      %1495 = vmatmul.mubr.bf16.gmra.mrb[0].mxu0 %v1211
      %v1496 = vpop.f32.mrb[0].mxu0
      %v1497 = vadd.f32 %v1252, %v1496
      %v1498 = vpop.f32.mrb[0].mxu0
      %v1499 = vpop.f32.mrb[0].mxu0
      %v1500 = vadd.f32 %v1252, %v1499
      %v1501 = vpop.f32.mrb[0].mxu0
      %1502 = vmatprep.mubr.bf16.mxu0 %v1214
      %1503 = vmatmul.mubr.bf16.gmra.mrb[0].mxu0 %v1213
      %v1504 = vpop.f32.mrb[0].mxu0
      %v1505 = vadd.f32 %v1252, %v1504
      %v1506 = vpop.f32.mrb[0].mxu0
      %v1507 = vpop.f32.mrb[0].mxu0
      %v1508 = vadd.f32 %v1252, %v1507
      %v1509 = vpop.f32.mrb[0].mxu0
      %1510 = vdwg.mxu0
      %v1511 = vmax.f32 %v1385, 0.0
      %v1512 = vmax.f32 %v1388, 0.0
      %v1513 = vmax.f32 %v1393, 0.0
      %v1514 = vmax.f32 %v1396, 0.0
      %v1515 = vmax.f32 %v1401, 0.0
      %v1516 = vmax.f32 %v1404, 0.0
      %v1517 = vmax.f32 %v1409, 0.0
      %v1518 = vmax.f32 %v1412, 0.0
      %v1519 = vmax.f32 %v1417, 0.0
      %v1520 = vmax.f32 %v1420, 0.0
      %v1521 = vmax.f32 %v1425, 0.0
      %v1522 = vmax.f32 %v1428, 0.0
      %v1523 = vmax.f32 %v1433, 0.0
      %v1524 = vmax.f32 %v1436, 0.0
      %v1525 = vmax.f32 %v1441, 0.0
      %v1526 = vmax.f32 %v1444, 0.0
      %v1527 = vmax.f32 %v1449, 0.0
      %v1528 = vmax.f32 %v1452, 0.0
      %v1529 = vmax.f32 %v1457, 0.0
      %v1530 = vmax.f32 %v1460, 0.0
      %v1531 = vmax.f32 %v1465, 0.0
      %v1532 = vmax.f32 %v1468, 0.0
      %v1533 = vmax.f32 %v1473, 0.0
      %v1534 = vmax.f32 %v1476, 0.0
      %v1535 = vmax.f32 %v1481, 0.0
      %v1536 = vmax.f32 %v1484, 0.0
      %v1537 = vmax.f32 %v1489, 0.0
      %v1538 = vmax.f32 %v1492, 0.0
      %v1539 = vmax.f32 %v1497, 0.0
      %v1540 = vmax.f32 %v1500, 0.0
      %v1541 = vmax.f32 %v1505, 0.0
      %v1542 = vmax.f32 %v1508, 0.0
      %v1543 = vld [vmem:[%s5] sm:$0x1]
      %v1545 = vlaneseq
      %v1546 = vshrl.u32 %v1545, 7
      %v1547 = vsub.s32 0, %v1546
      %v1548 = vrot.slane %v1543, %v1547
      %v1550 = vmul.f32 %v1511, %v1548
      %v1551 = vmul.f32 %v1512, %v1548
      %v1552 = vmul.f32 %v1513, %v1548
      %v1553 = vmul.f32 %v1514, %v1548
      %v1554 = vmul.f32 %v1515, %v1548
      %v1555 = vmul.f32 %v1516, %v1548
      %v1556 = vmul.f32 %v1517, %v1548
      %v1557 = vmul.f32 %v1518, %v1548
      %v1558 = vmul.f32 %v1519, %v1548
      %v1559 = vmul.f32 %v1520, %v1548
      %v1560 = vmul.f32 %v1521, %v1548
      %v1561 = vmul.f32 %v1522, %v1548
      %v1562 = vmul.f32 %v1523, %v1548
      %v1563 = vmul.f32 %v1524, %v1548
      %v1564 = vmul.f32 %v1525, %v1548
      %v1565 = vmul.f32 %v1526, %v1548
      %v1566 = vmul.f32 %v1527, %v1548
      %v1567 = vmul.f32 %v1528, %v1548
      %v1568 = vmul.f32 %v1529, %v1548
      %v1569 = vmul.f32 %v1530, %v1548
      %v1570 = vmul.f32 %v1531, %v1548
      %v1571 = vmul.f32 %v1532, %v1548
      %v1572 = vmul.f32 %v1533, %v1548
      %v1573 = vmul.f32 %v1534, %v1548
      %v1574 = vmul.f32 %v1535, %v1548
      %v1575 = vmul.f32 %v1536, %v1548
      %v1576 = vmul.f32 %v1537, %v1548
      %v1577 = vmul.f32 %v1538, %v1548
      %v1578 = vmul.f32 %v1539, %v1548
      %v1579 = vmul.f32 %v1540, %v1548
      %v1580 = vmul.f32 %v1541, %v1548
      %v1581 = vmul.f32 %v1542, %v1548
      %1582 = vadd.xlane.f32.xlu0 %v1550
      %v1583 = vpop.xlane.xlu0 %1582
      %1584 = vadd.xlane.f32.xlu0 %v1551
      %v1585 = vpop.xlane.xlu0 %1584
      %1586 = vadd.xlane.f32.xlu0 %v1552
      %v1587 = vpop.xlane.xlu0 %1586
      %1588 = vadd.xlane.f32.xlu0 %v1553
      %v1589 = vpop.xlane.xlu0 %1588
      %1590 = vadd.xlane.f32.xlu0 %v1554
      %v1591 = vpop.xlane.xlu0 %1590
      %1592 = vadd.xlane.f32.xlu0 %v1555
      %v1593 = vpop.xlane.xlu0 %1592
      %1594 = vadd.xlane.f32.xlu0 %v1556
      %v1595 = vpop.xlane.xlu0 %1594
      %1596 = vadd.xlane.f32.xlu0 %v1557
      %v1597 = vpop.xlane.xlu0 %1596
      %1598 = vadd.xlane.f32.xlu0 %v1558
      %v1599 = vpop.xlane.xlu0 %1598
      %1600 = vadd.xlane.f32.xlu0 %v1559
      %v1601 = vpop.xlane.xlu0 %1600
      %1602 = vadd.xlane.f32.xlu0 %v1560
      %v1603 = vpop.xlane.xlu0 %1602
      %1604 = vadd.xlane.f32.xlu0 %v1561
      %v1605 = vpop.xlane.xlu0 %1604
      %1606 = vadd.xlane.f32.xlu0 %v1562
      %v1607 = vpop.xlane.xlu0 %1606
      %1608 = vadd.xlane.f32.xlu0 %v1563
      %v1609 = vpop.xlane.xlu0 %1608
      %1610 = vadd.xlane.f32.xlu0 %v1564
      %v1611 = vpop.xlane.xlu0 %1610
      %1612 = vadd.xlane.f32.xlu0 %v1565
      %v1613 = vpop.xlane.xlu0 %1612
      %1614 = vadd.xlane.f32.xlu0 %v1566
      %v1615 = vpop.xlane.xlu0 %1614
      %1616 = vadd.xlane.f32.xlu0 %v1567
      %v1617 = vpop.xlane.xlu0 %1616
      %1618 = vadd.xlane.f32.xlu0 %v1568
      %v1619 = vpop.xlane.xlu0 %1618
      %1620 = vadd.xlane.f32.xlu0 %v1569
      %v1621 = vpop.xlane.xlu0 %1620
      %1622 = vadd.xlane.f32.xlu0 %v1570
      %v1623 = vpop.xlane.xlu0 %1622
      %1624 = vadd.xlane.f32.xlu0 %v1571
      %v1625 = vpop.xlane.xlu0 %1624
      %1626 = vadd.xlane.f32.xlu0 %v1572
      %v1627 = vpop.xlane.xlu0 %1626
      %1628 = vadd.xlane.f32.xlu0 %v1573
      %v1629 = vpop.xlane.xlu0 %1628
      %1630 = vadd.xlane.f32.xlu0 %v1574
      %v1631 = vpop.xlane.xlu0 %1630
      %1632 = vadd.xlane.f32.xlu0 %v1575
      %v1633 = vpop.xlane.xlu0 %1632
      %1634 = vadd.xlane.f32.xlu0 %v1576
      %v1635 = vpop.xlane.xlu0 %1634
      %1636 = vadd.xlane.f32.xlu0 %v1577
      %v1637 = vpop.xlane.xlu0 %1636
      %1638 = vadd.xlane.f32.xlu0 %v1578
      %v1639 = vpop.xlane.xlu0 %1638
      %1640 = vadd.xlane.f32.xlu0 %v1579
      %v1641 = vpop.xlane.xlu0 %1640
      %1642 = vadd.xlane.f32.xlu0 %v1580
      %v1643 = vpop.xlane.xlu0 %1642
      %1644 = vadd.xlane.f32.xlu0 %v1581
      %v1645 = vpop.xlane.xlu0 %1644
      %v1646 = vld [vmem:[#allocation2] sm:$0x1]
      %v1648 = vlaneseq
      %v1649 = vshrl.u32 %v1648, 7
      %v1650 = vsub.s32 0, %v1649
      %v1651 = vrot.slane %v1646, %v1650
      %v1653 = vadd.f32 %v1583, %v1651
      %v1654 = vadd.f32 %v1585, %v1651
      %v1655 = vadd.f32 %v1587, %v1651
      %v1656 = vadd.f32 %v1589, %v1651
      %v1657 = vadd.f32 %v1591, %v1651
      %v1658 = vadd.f32 %v1593, %v1651
      %v1659 = vadd.f32 %v1595, %v1651
      %v1660 = vadd.f32 %v1597, %v1651
      %v1661 = vadd.f32 %v1599, %v1651
      %v1662 = vadd.f32 %v1601, %v1651
      %v1663 = vadd.f32 %v1603, %v1651
      %v1664 = vadd.f32 %v1605, %v1651
      %v1665 = vadd.f32 %v1607, %v1651
      %v1666 = vadd.f32 %v1609, %v1651
      %v1667 = vadd.f32 %v1611, %v1651
      %v1668 = vadd.f32 %v1613, %v1651
      %v1669 = vadd.f32 %v1615, %v1651
      %v1670 = vadd.f32 %v1617, %v1651
      %v1671 = vadd.f32 %v1619, %v1651
      %v1672 = vadd.f32 %v1621, %v1651
      %v1673 = vadd.f32 %v1623, %v1651
      %v1674 = vadd.f32 %v1625, %v1651
      %v1675 = vadd.f32 %v1627, %v1651
      %v1676 = vadd.f32 %v1629, %v1651
      %v1677 = vadd.f32 %v1631, %v1651
      %v1678 = vadd.f32 %v1633, %v1651
      %v1679 = vadd.f32 %v1635, %v1651
      %v1680 = vadd.f32 %v1637, %v1651
      %v1681 = vadd.f32 %v1639, %v1651
      %v1682 = vadd.f32 %v1641, %v1651
      %v1683 = vadd.f32 %v1643, %v1651
      %v1684 = vadd.f32 %v1645, %v1651
      %v1685 = vsub.f32 0.0, %v1653
      %v1686 = vsub.f32 0.0, %v1654
      %v1687 = vsub.f32 0.0, %v1655
      %v1688 = vsub.f32 0.0, %v1656
      %v1689 = vsub.f32 0.0, %v1657
      %v1690 = vsub.f32 0.0, %v1658
      %v1691 = vsub.f32 0.0, %v1659
      %v1692 = vsub.f32 0.0, %v1660
      %v1693 = vsub.f32 0.0, %v1661
      %v1694 = vsub.f32 0.0, %v1662
      %v1695 = vsub.f32 0.0, %v1663
      %v1696 = vsub.f32 0.0, %v1664
      %v1697 = vsub.f32 0.0, %v1665
      %v1698 = vsub.f32 0.0, %v1666
      %v1699 = vsub.f32 0.0, %v1667
      %v1700 = vsub.f32 0.0, %v1668
      %v1701 = vsub.f32 0.0, %v1669
      %v1702 = vsub.f32 0.0, %v1670
      %v1703 = vsub.f32 0.0, %v1671
      %v1704 = vsub.f32 0.0, %v1672
      %v1705 = vsub.f32 0.0, %v1673
      %v1706 = vsub.f32 0.0, %v1674
      %v1707 = vsub.f32 0.0, %v1675
      %v1708 = vsub.f32 0.0, %v1676
      %v1709 = vsub.f32 0.0, %v1677
      %v1710 = vsub.f32 0.0, %v1678
      %v1711 = vsub.f32 0.0, %v1679
      %v1712 = vsub.f32 0.0, %v1680
      %v1713 = vsub.f32 0.0, %v1681
      %v1714 = vsub.f32 0.0, %v1682
      %v1715 = vsub.f32 0.0, %v1683
      %v1716 = vsub.f32 0.0, %v1684
      %v1717 = vmul.f32 %v1685, 1.442695
      %v1718 = vpow.pop %v1717
      %v1719 = vmul.f32 %v1686, 1.442695
      %v1720 = vpow.pop %v1719
      %v1721 = vmul.f32 %v1687, 1.442695
      %v1722 = vpow.pop %v1721
      %v1723 = vmul.f32 %v1688, 1.442695
      %v1724 = vpow.pop %v1723
      %v1725 = vmul.f32 %v1689, 1.442695
      %v1726 = vpow.pop %v1725
      %v1727 = vmul.f32 %v1690, 1.442695
      %v1728 = vpow.pop %v1727
      %v1729 = vmul.f32 %v1691, 1.442695
      %v1730 = vpow.pop %v1729
      %v1731 = vmul.f32 %v1692, 1.442695
      %v1732 = vpow.pop %v1731
      %v1733 = vmul.f32 %v1693, 1.442695
      %v1734 = vpow.pop %v1733
      %v1735 = vmul.f32 %v1694, 1.442695
      %v1736 = vpow.pop %v1735
      %v1737 = vmul.f32 %v1695, 1.442695
      %v1738 = vpow.pop %v1737
      %v1739 = vmul.f32 %v1696, 1.442695
      %v1740 = vpow.pop %v1739
      %v1741 = vmul.f32 %v1697, 1.442695
      %v1742 = vpow.pop %v1741
      %v1743 = vmul.f32 %v1698, 1.442695
      %v1744 = vpow.pop %v1743
      %v1745 = vmul.f32 %v1699, 1.442695
      %v1746 = vpow.pop %v1745
      %v1747 = vmul.f32 %v1700, 1.442695
      %v1748 = vpow.pop %v1747
      %v1749 = vmul.f32 %v1701, 1.442695
      %v1750 = vpow.pop %v1749
      %v1751 = vmul.f32 %v1702, 1.442695
      %v1752 = vpow.pop %v1751
      %v1753 = vmul.f32 %v1703, 1.442695
      %v1754 = vpow.pop %v1753
      %v1755 = vmul.f32 %v1704, 1.442695
      %v1756 = vpow.pop %v1755
      %v1757 = vmul.f32 %v1705, 1.442695
      %v1758 = vpow.pop %v1757
      %v1759 = vmul.f32 %v1706, 1.442695
      %v1760 = vpow.pop %v1759
      %v1761 = vmul.f32 %v1707, 1.442695
      %v1762 = vpow.pop %v1761
      %v1763 = vmul.f32 %v1708, 1.442695
      %v1764 = vpow.pop %v1763
      %v1765 = vmul.f32 %v1709, 1.442695
      %v1766 = vpow.pop %v1765
      %v1767 = vmul.f32 %v1710, 1.442695
      %v1768 = vpow.pop %v1767
      %v1769 = vmul.f32 %v1711, 1.442695
      %v1770 = vpow.pop %v1769
      %v1771 = vmul.f32 %v1712, 1.442695
      %v1772 = vpow.pop %v1771
      %v1773 = vmul.f32 %v1713, 1.442695
      %v1774 = vpow.pop %v1773
      %v1775 = vmul.f32 %v1714, 1.442695
      %v1776 = vpow.pop %v1775
      %v1777 = vmul.f32 %v1715, 1.442695
      %v1778 = vpow.pop %v1777
      %v1779 = vmul.f32 %v1716, 1.442695
      %v1780 = vpow.pop %v1779
      %v1781 = vadd.f32 %v1718, 1.0
      %v1782 = vadd.f32 %v1720, 1.0
      %v1783 = vadd.f32 %v1722, 1.0
      %v1784 = vadd.f32 %v1724, 1.0
      %v1785 = vadd.f32 %v1726, 1.0
      %v1786 = vadd.f32 %v1728, 1.0
      %v1787 = vadd.f32 %v1730, 1.0
      %v1788 = vadd.f32 %v1732, 1.0
      %v1789 = vadd.f32 %v1734, 1.0
      %v1790 = vadd.f32 %v1736, 1.0
      %v1791 = vadd.f32 %v1738, 1.0
      %v1792 = vadd.f32 %v1740, 1.0
      %v1793 = vadd.f32 %v1742, 1.0
      %v1794 = vadd.f32 %v1744, 1.0
      %v1795 = vadd.f32 %v1746, 1.0
      %v1796 = vadd.f32 %v1748, 1.0
      %v1797 = vadd.f32 %v1750, 1.0
      %v1798 = vadd.f32 %v1752, 1.0
      %v1799 = vadd.f32 %v1754, 1.0
      %v1800 = vadd.f32 %v1756, 1.0
      %v1801 = vadd.f32 %v1758, 1.0
      %v1802 = vadd.f32 %v1760, 1.0
      %v1803 = vadd.f32 %v1762, 1.0
      %v1804 = vadd.f32 %v1764, 1.0
      %v1805 = vadd.f32 %v1766, 1.0
      %v1806 = vadd.f32 %v1768, 1.0
      %v1807 = vadd.f32 %v1770, 1.0
      %v1808 = vadd.f32 %v1772, 1.0
      %v1809 = vadd.f32 %v1774, 1.0
      %v1810 = vadd.f32 %v1776, 1.0
      %v1811 = vadd.f32 %v1778, 1.0
      %v1812 = vadd.f32 %v1780, 1.0
      %v1813 = vrcp.pop %v1781
      %v1814 = vrcp.pop %v1782
      %v1815 = vrcp.pop %v1783
      %v1816 = vrcp.pop %v1784
      %v1817 = vrcp.pop %v1785
      %v1818 = vrcp.pop %v1786
      %v1819 = vrcp.pop %v1787
      %v1820 = vrcp.pop %v1788
      %v1821 = vrcp.pop %v1789
      %v1822 = vrcp.pop %v1790
      %v1823 = vrcp.pop %v1791
      %v1824 = vrcp.pop %v1792
      %v1825 = vrcp.pop %v1793
      %v1826 = vrcp.pop %v1794
      %v1827 = vrcp.pop %v1795
      %v1828 = vrcp.pop %v1796
      %v1829 = vrcp.pop %v1797
      %v1830 = vrcp.pop %v1798
      %v1831 = vrcp.pop %v1799
      %v1832 = vrcp.pop %v1800
      %v1833 = vrcp.pop %v1801
      %v1834 = vrcp.pop %v1802
      %v1835 = vrcp.pop %v1803
      %v1836 = vrcp.pop %v1804
      %v1837 = vrcp.pop %v1805
      %v1838 = vrcp.pop %v1806
      %v1839 = vrcp.pop %v1807
      %v1840 = vrcp.pop %v1808
      %v1841 = vrcp.pop %v1809
      %v1842 = vrcp.pop %v1810
      %v1843 = vrcp.pop %v1811
      %v1844 = vrcp.pop %v1812
      %vm1845 = vcmask 7168
      %1846 = vst.msk [vmem:[%s285] sm:$0xff] %vm1845, %v1813
      %1847 = vst.msk [vmem:[%s285 + $0x8] sm:$0xff] %vm1845, %v1814
      %1848 = vst.msk [vmem:[%s285 + $0x10] sm:$0xff] %vm1845, %v1815
      %1849 = vst.msk [vmem:[%s285 + $0x18] sm:$0xff] %vm1845, %v1816
      %1850 = vst.msk [vmem:[%s285 + $0x20] sm:$0xff] %vm1845, %v1817
      %1851 = vst.msk [vmem:[%s285 + $0x28] sm:$0xff] %vm1845, %v1818
      %1852 = vst.msk [vmem:[%s285 + $0x30] sm:$0xff] %vm1845, %v1819
      %1853 = vst.msk [vmem:[%s285 + $0x38] sm:$0xff] %vm1845, %v1820
      %1854 = vst.msk [vmem:[%s285 + $0x40] sm:$0xff] %vm1845, %v1821
      %1855 = vst.msk [vmem:[%s285 + $0x48] sm:$0xff] %vm1845, %v1822
      %1856 = vst.msk [vmem:[%s285 + $0x50] sm:$0xff] %vm1845, %v1823
      %1857 = vst.msk [vmem:[%s285 + $0x58] sm:$0xff] %vm1845, %v1824
      %1858 = vst.msk [vmem:[%s285 + $0x60] sm:$0xff] %vm1845, %v1825
      %1859 = vst.msk [vmem:[%s285 + $0x68] sm:$0xff] %vm1845, %v1826
      %1860 = vst.msk [vmem:[%s285 + $0x70] sm:$0xff] %vm1845, %v1827
      %1861 = vst.msk [vmem:[%s285 + $0x78] sm:$0xff] %vm1845, %v1828
      %1862 = vst.msk [vmem:[%s285 + $0x80] sm:$0xff] %vm1845, %v1829
      %1863 = vst.msk [vmem:[%s285 + $0x88] sm:$0xff] %vm1845, %v1830
      %1864 = vst.msk [vmem:[%s285 + $0x90] sm:$0xff] %vm1845, %v1831
      %1865 = vst.msk [vmem:[%s285 + $0x98] sm:$0xff] %vm1845, %v1832
      %1866 = vst.msk [vmem:[%s285 + $0xa0] sm:$0xff] %vm1845, %v1833
      %1867 = vst.msk [vmem:[%s285 + $0xa8] sm:$0xff] %vm1845, %v1834
      %1868 = vst.msk [vmem:[%s285 + $0xb0] sm:$0xff] %vm1845, %v1835
      %1869 = vst.msk [vmem:[%s285 + $0xb8] sm:$0xff] %vm1845, %v1836
      %1870 = vst.msk [vmem:[%s285 + $0xc0] sm:$0xff] %vm1845, %v1837
      %1871 = vst.msk [vmem:[%s285 + $0xc8] sm:$0xff] %vm1845, %v1838
      %1872 = vst.msk [vmem:[%s285 + $0xd0] sm:$0xff] %vm1845, %v1839
      %1873 = vst.msk [vmem:[%s285 + $0xd8] sm:$0xff] %vm1845, %v1840
      %1874 = vst.msk [vmem:[%s285 + $0xe0] sm:$0xff] %vm1845, %v1841
      %1875 = vst.msk [vmem:[%s285 + $0xe8] sm:$0xff] %vm1845, %v1842
      %1876 = vst.msk [vmem:[%s285 + $0xf0] sm:$0xff] %vm1845, %v1843
      %1877 = vst.msk [vmem:[%s285 + $0xf8] sm:$0xff] %vm1845, %v1844
      %s1878 = smul.u32 32, %s20
      %p1879 = scmp.lt.s32.totalorder %s1878, 63
      %s1880 = scalar_select %p1879, %s1878, 63
      %s1881 = smul.addr %s1880, 8
      %s1882 = scalar_lea.vmem %s7, %s1881
      // Predicated region
      $region49: #{tpu_custom_call.1} parent=47 // pred_check
        %p1883 = pneg %p190
      $region50: #{tpu_custom_call.1} parent=47 // pred_check_branch
        %1885 = sbr.rel (%p1883) target = $region52
      $region51: #{tpu_custom_call.1} parent=47 // pred_region
        %s1886 = smul.u32 32, %s20
      $region52: #{tpu_custom_call.1} parent=47 // pred_fallthru
        _
    $region48: #{tpu_custom_call.1} parent=5 // pred_fallthru
      _
    %p1887 = scmp.le.s32.totalorder 2, %s15
    // Predicated region
    $region53: #{tpu_custom_call.1} parent=5 // pred_check
      %p1888 = pneg %p1887
    $region54: #{tpu_custom_call.1} parent=5 // pred_check_branch
      %1890 = sbr.rel (%p1888) target = $region56
    $region55: #{tpu_custom_call.1} parent=5 // pred_region
      %s1891 = ssub.s32 %s15, 2
      // Predicated region
      $region57: #{tpu_custom_call.1} parent=55 // pred_check
        %p1892 = pneg %p196
      $region58: #{tpu_custom_call.1} parent=55 // pred_check_branch
        %1894 = sbr.rel (%p1892) target = $region60
      $region59: #{tpu_custom_call.1} parent=55 // pred_region
        %s1895 = smul.u32 32, %s21
        %p1896 = scmp.lt.s32.totalorder %s1895, 63
        %s1897 = scalar_select %p1896, %s1895, 63
        %s1898 = smul.addr %s1897, 8
        %s1899 = scalar_lea.vmem %s7, %s1898
      $region60: #{tpu_custom_call.1} parent=55 // pred_fallthru
        _
    $region56: #{tpu_custom_call.1} parent=5 // pred_fallthru
      _
  $region6: #{tpu_custom_call.1} parent=0 // loop_footer
    %s19 = sadd.s32 1, %s15
  $region7: #{tpu_custom_call.1} parent=0 // loop_footer_branch
    %14 = sbr.rel target = $region3
  $region8: #{tpu_custom_call.1} parent=0 // loop_exit
    _

</llo_original>
